<compile_context>
chip_gen: v6e
topology: v6e:2x2x1
jax: 0.10.0
libtpu: 0.0.40
codegen_flags: <defaults>
</compile_context>

<pallas_src>
import jax
import jax.numpy as jnp
from jax import lax
from jax.experimental import pallas as pl
from jax.experimental.pallas import tpu as pltpu


def _rup(n, m):
    return ((n + m - 1) // m) * m


def _full_spec(shape):
    # whole-array block: everything here is KB-scale and lives in VMEM
    return pl.BlockSpec(shape, lambda: (0,) * len(shape))


# --------------------------------------------------------------------------
# Fused forward kernel: projection -> n_layers WeightedSAGEConv -> residual
#                       -> ItemToItemScorer on pos/neg graphs -> margin
# --------------------------------------------------------------------------
def _make_fused_kernel(n_layers, ns_p, nd_p, e_pad):
    nd_last_p = nd_p[-1]

    def kernel(x_ref, wp_ref, bp_ref, *rest):
        layer_refs = rest[: 5 * n_layers]
        sel_ref, bd_ref, o_ref = rest[5 * n_layers:]

        # ---- LinearProjector: h = x @ Wp + bp   (bf16 MXU, f32 accumulation)
        h = (jnp.dot(x_ref[...], wp_ref[...],
                     preferred_element_type=jnp.float32) + bp_ref[...])
        # final dst nodes are (by MFG construction) the first rows of block0 src
        h_item_dst = h[:nd_last_p]

        # ---- SAGENet: per-block WeightedSAGEConv, h stays on-chip
        for l in range(n_layers):
            a_ref, q_ref, bq_ref, w_ref, bw_ref = layer_refs[5 * l: 5 * l + 5]

            h_src = h[:ns_p[l]]
            h_dst = h[:nd_p[l]]

            n = jnp.maximum(
                jnp.dot(h_src.astype(jnp.bfloat16), q_ref[...],
                        preferred_element_type=jnp.float32) + bq_ref[...], 0.0)

            a = a_ref[...]                                        # bf16 (nd_p, ns_p)
            agg = jnp.dot(a, n.astype(jnp.bfloat16),
                          preferred_element_type=jnp.float32)
            ws = jnp.sum(a.astype(jnp.float32), axis=1, keepdims=True)
            inv_ws = pl.reciprocal(jnp.maximum(ws, 1.0), approx=True)   # EUP

            # merged W: [agg/ws, h_dst] @ [Wn; Wd]  -> one K=2H MXU pass
            hcat = jnp.concatenate([agg * inv_ws, h_dst], axis=1)
            z = jnp.maximum(
                jnp.dot(hcat.astype(jnp.bfloat16), w_ref[...],
                        preferred_element_type=jnp.float32) + bw_ref[...], 0.0)

            ss = jnp.sum(z * z, axis=1, keepdims=True)
            inv_norm = jnp.where(ss == 0.0, 1.0, lax.rsqrt(ss))    # EUP; 0-norm -> 1
            h = z * inv_norm                                       # (nd_p[l], H) f32

        # ---- get_repr residual
        h_repr = h_item_dst + h                                    # (nd_last_p, H) f32

        # ---- ItemToItemScorer + margin (one stacked gather matmul, on-chip)
        # sel_ref rows: [pos_src ; pos_dst ; neg_src ; neg_dst], each e_pad rows
        gathered = jnp.dot(sel_ref[...], h_repr,
                           preferred_element_type=jnp.float32)     # (4*e_pad, H)
        hs_p = gathered[:e_pad]
        hd_p = gathered[e_pad:2 * e_pad]
        hs_n = gathered[2 * e_pad:3 * e_pad]
        hd_n = gathered[3 * e_pad:]
        diff = jnp.sum(hs_n * hd_n - hs_p * hd_p, axis=1)[None, :]  # (1, e_pad)
        # bd_ref already holds (neg_bias - pos_bias); margin + relu
        o_ref[...] = jnp.maximum(diff + bd_ref[...] + 1.0, 0.0)

    return kernel


# --------------------------------------------------------------------------
# Model wrapper (host glue: padding, dtype casts, one-hot edge selection)
# --------------------------------------------------------------------------
def pinsage_forward(params, src_feats, block_adjs, node_ids,
                    pos_edges, neg_edges):
    """
    src_feats : (Ns0, F)  features of blocks[0] src nodes (final dst nodes are
                the first rows, as in DGL MFGs)
    block_adjs: list of dense edge-weight matrices, block l -> (Nd_l, Ns_l)
    node_ids  : (Nd_last,) global node ids of the final dst items (for bias)
    pos_edges / neg_edges: (E, 2) int arrays of (src, dst) local indices
    """
    n_layers = len(block_adjs)
    ns = [int(a.shape[1]) for a in block_adjs]
    nd = [int(a.shape[0]) for a in block_adjs]
    ns_p = [_rup(n, 8) for n in ns]          # sublane-aligned row counts
    nd_p = [_rup(n, 8) for n in nd]
    nd_last = nd[-1]
    nd_last_p = nd_p[-1]

    E = int(pos_edges.shape[0])
    E_pad = max(128, _rup(E, 128))           # lane-dense scorer output

    # pad raw feature dim to a multiple of 128 (lane alignment); bf16 MXU operands
    F = int(src_feats.shape[1])
    F_pad = _rup(F, 128)
    x = jnp.pad(src_feats,
                ((0, ns_p[0] - ns[0]), (0, F_pad - F))).astype(jnp.bfloat16)
    wp = jnp.pad(params["proj_w"], ((0, F_pad - F), (0, 0))).astype(jnp.bfloat16)
    bp = params["proj_b"].astype(jnp.float32)

    layer_args = []
    for l, (adj, layer) in enumerate(zip(block_adjs, params["sage"])):
        a = jnp.pad(adj, ((0, nd_p[l] - nd[l]), (0, ns_p[l] - ns[l])))
        w_cat = jnp.concatenate([layer["wn"], layer["wd"]], axis=0)   # (2H, H)
        layer_args += [a.astype(jnp.bfloat16),
                       layer["q"].astype(jnp.bfloat16),
                       layer["bq"].astype(jnp.float32),
                       w_cat.astype(jnp.bfloat16),
                       layer["bw"].astype(jnp.float32)]

    # one-hot edge-endpoint selection (stacked: pos_src/pos_dst/neg_src/neg_dst)
    # + per-edge bias delta (neg - pos), tiny host glue
    bias = params["scorer_bias"]

    def sel_of(idx):
        s = jax.nn.one_hot(idx, nd_last_p, dtype=jnp.float32)        # (E, nd_last_p)
        return jnp.pad(s, ((0, E_pad - E), (0, 0)))

    sel_all = jnp.concatenate(
        [sel_of(pos_edges[:, 0]), sel_of(pos_edges[:, 1]),
         sel_of(neg_edges[:, 0]), sel_of(neg_edges[:, 1])], axis=0)   # (4*E_pad, nd_last_p)

    b_pos = bias[node_ids[pos_edges[:, 0]]] + bias[node_ids[pos_edges[:, 1]]]
    b_neg = bias[node_ids[neg_edges[:, 0]]] + bias[node_ids[neg_edges[:, 1]]]
    bias_delta = jnp.pad(b_neg - b_pos,
                         (0, E_pad - E))[None, :].astype(jnp.float32)  # (1, E_pad)

    inputs = [x, wp, bp] + layer_args + [sel_all, bias_delta]
    kernel = _make_fused_kernel(n_layers, ns_p, nd_p, E_pad)

    out = pl.pallas_call(
        kernel,
        out_shape=jax.ShapeDtypeStruct((1, E_pad), jnp.float32),
        in_specs=[_full_spec(a.shape) for a in inputs],
        out_specs=_full_spec((1, E_pad)),
        compiler_params=pltpu.CompilerParams(vmem_limit_bytes=32 << 20),
    )(*inputs)

    return out[0, :E].reshape(E, 1)      # (E, 1), matches reference shape


# --------------------------------------------------------------------------
def make_params(key, feat_dim, hidden_dims, n_layers, n_graph_nodes):
    ks = jax.random.split(key, 1 + 3 * n_layers)
    it = iter(ks)

    def dense(k, fan_in, fan_out):
        return (jax.random.normal(k, (fan_in, fan_out), jnp.float32)
                / jnp.sqrt(jnp.float32(fan_in)))

    params = {
        "proj_w": dense(next(it), feat_dim, hidden_dims),
        "proj_b": jnp.zeros((1, hidden_dims), jnp.float32),
        "sage": [],
        # ItemToItemScorer: nn.Parameter(torch.zeros(n_nodes))
        "scorer_bias": jnp.zeros((n_graph_nodes,), jnp.float32),
    }
    for _ in range(n_layers):
        params["sage"].append({
            "q":  dense(next(it), hidden_dims, hidden_dims),
            "bq": jnp.zeros((1, hidden_dims), jnp.float32),
            # W acts on cat([agg/ws, h_dst]); kept split here, merged in wrapper
            "wn": dense(next(it), hidden_dims, hidden_dims),
            "wd": dense(next(it), hidden_dims, hidden_dims),
            "bw": jnp.zeros((1, hidden_dims), jnp.float32),
        })
    return params


if __name__ == "__main__":
    key = jax.random.PRNGKey(0)
    k_feat, k_param, k_a0, k_a1, k_pe, k_ne, k_ids = jax.random.split(key, 7)

    # small, shape-consistent sizes
    F = 64            # raw node-feature dim (LinearProjector input)
    H = 128           # hidden_dims
    N_LAYERS = 2
    NS0, ND0, ND1 = 32, 16, 8     # block0: 32 src -> 16 dst ; block1: 16 -> 8
    E = 8                         # edges in pos_graph / neg_graph
    N_GRAPH_NODES = 100           # full graph item count (scorer bias size)

    params = make_params(k_param, F, H, N_LAYERS, N_GRAPH_NODES)

    # node features of blocks[0] src nodes (final dst nodes are the first rows)
    src_feats = jax.random.normal(k_feat, (NS0, F), jnp.float32)

    # dense edge-weight matrices for the two message-flow blocks
    a0 = jax.random.randint(k_a0, (ND0, NS0), 0, 4).astype(jnp.float32)
    a1 = jax.random.randint(k_a1, (ND1, ND0), 0, 4).astype(jnp.float32)
    block_adjs = [a0, a1]

    # pos/neg item-item graphs over the ND1 final items
    pos_edges = jax.random.randint(k_pe, (E, 2), 0, ND1)
    neg_edges = jax.random.randint(k_ne, (E, 2), 0, ND1)
    node_ids = jax.random.randint(k_ids, (ND1,), 0, N_GRAPH_NODES)

    out = pinsage_forward(params, src_feats, block_adjs, node_ids,
                          pos_edges, neg_edges)
    out = jax.block_until_ready(out)

    assert out.shape == (E, 1) and out.dtype == jnp.float32
    assert bool(jnp.all(jnp.isfinite(out))) and bool(jnp.all(out >= 0.0))
    print("KERNEL_OK")
</pallas_src>

<mosaic_0001>
module attributes {stable_mosaic.version = 11 : i64} {
  func.func @kernel(%arg0: memref<32x128xbf16, #tpu.memory_space<vmem>>, %arg1: memref<128x128xbf16, #tpu.memory_space<vmem>>, %arg2: memref<1x128xf32, #tpu.memory_space<vmem>>, %arg3: memref<16x32xbf16, #tpu.memory_space<vmem>>, %arg4: memref<128x128xbf16, #tpu.memory_space<vmem>>, %arg5: memref<1x128xf32, #tpu.memory_space<vmem>>, %arg6: memref<256x128xbf16, #tpu.memory_space<vmem>>, %arg7: memref<1x128xf32, #tpu.memory_space<vmem>>, %arg8: memref<8x16xbf16, #tpu.memory_space<vmem>>, %arg9: memref<128x128xbf16, #tpu.memory_space<vmem>>, %arg10: memref<1x128xf32, #tpu.memory_space<vmem>>, %arg11: memref<256x128xbf16, #tpu.memory_space<vmem>>, %arg12: memref<1x128xf32, #tpu.memory_space<vmem>>, %arg13: memref<512x8xf32, #tpu.memory_space<vmem>>, %arg14: memref<1x128xf32, #tpu.memory_space<vmem>>, %arg15: memref<1x128xf32, #tpu.memory_space<vmem>>) attributes {dimension_semantics = [], scalar_prefetch = 0 : i64, scratch_operands = 0 : i64, tpu.core_type = #tpu.core_type<tc>} {
    %c0 = arith.constant 0 : index
    %c0_0 = arith.constant 0 : index
    %0 = vector.load %arg0[%c0, %c0_0] : memref<32x128xbf16, #tpu.memory_space<vmem>>, vector<32x128xbf16>
    %c0_1 = arith.constant 0 : index
    %c0_2 = arith.constant 0 : index
    %1 = vector.load %arg1[%c0_1, %c0_2] : memref<128x128xbf16, #tpu.memory_space<vmem>>, vector<128x128xbf16>
    %cst = arith.constant dense<0.000000e+00> : vector<32x128xf32>
    %2 = tpu.matmul %0, %1, %cst {dimension_numbers = #tpu.dot_dimension_numbers<[1], [0], [0], [1], [0, 0, 1, 1], [], []>} : vector<32x128xbf16>, vector<128x128xbf16>, vector<32x128xf32> -> vector<32x128xf32>
    %c0_3 = arith.constant 0 : index
    %c0_4 = arith.constant 0 : index
    %3 = vector.load %arg2[%c0_3, %c0_4] : memref<1x128xf32, #tpu.memory_space<vmem>>, vector<1x128xf32>
    %4 = vector.broadcast %3 : vector<1x128xf32> to vector<32x128xf32>
    %5 = arith.addf %2, %4 : vector<32x128xf32>
    %6 = vector.extract_strided_slice %5 {offsets = [0, 0], sizes = [8, 128], strides = [1, 1]} : vector<32x128xf32> to vector<8x128xf32>
    %7 = vector.extract_strided_slice %5 {offsets = [0, 0], sizes = [16, 128], strides = [1, 1]} : vector<32x128xf32> to vector<16x128xf32>
    %8 = arith.truncf %5 : vector<32x128xf32> to vector<32x128xbf16>
    %c0_5 = arith.constant 0 : index
    %c0_6 = arith.constant 0 : index
    %9 = vector.load %arg4[%c0_5, %c0_6] : memref<128x128xbf16, #tpu.memory_space<vmem>>, vector<128x128xbf16>
    %cst_7 = arith.constant dense<0.000000e+00> : vector<32x128xf32>
    %10 = tpu.matmul %8, %9, %cst_7 {dimension_numbers = #tpu.dot_dimension_numbers<[1], [0], [0], [1], [0, 0, 1, 1], [], []>} : vector<32x128xbf16>, vector<128x128xbf16>, vector<32x128xf32> -> vector<32x128xf32>
    %c0_8 = arith.constant 0 : index
    %c0_9 = arith.constant 0 : index
    %11 = vector.load %arg5[%c0_8, %c0_9] : memref<1x128xf32, #tpu.memory_space<vmem>>, vector<1x128xf32>
    %12 = vector.broadcast %11 : vector<1x128xf32> to vector<32x128xf32>
    %13 = arith.addf %10, %12 : vector<32x128xf32>
    %cst_10 = arith.constant 0.000000e+00 : f32
    %14 = vector.broadcast %cst_10 : f32 to vector<32x128xf32>
    %15 = arith.maximumf %13, %14 : vector<32x128xf32>
    %c0_11 = arith.constant 0 : index
    %c0_12 = arith.constant 0 : index
    %16 = vector.load %arg3[%c0_11, %c0_12] : memref<16x32xbf16, #tpu.memory_space<vmem>>, vector<16x32xbf16>
    %17 = arith.truncf %15 : vector<32x128xf32> to vector<32x128xbf16>
    %cst_13 = arith.constant dense<0.000000e+00> : vector<16x128xf32>
    %18 = tpu.matmul %16, %17, %cst_13 {dimension_numbers = #tpu.dot_dimension_numbers<[1], [0], [0], [1], [0, 0, 1, 1], [], []>} : vector<16x32xbf16>, vector<32x128xbf16>, vector<16x128xf32> -> vector<16x128xf32>
    %19 = arith.extf %16 : vector<16x32xbf16> to vector<16x32xf32>
    %cst_14 = arith.constant dense<0.000000e+00> : vector<16xf32>
    %20 = vector.multi_reduction <add>, %19, %cst_14 [1] : vector<16x32xf32> to vector<16xf32>
    %21 = vector.shape_cast %20 : vector<16xf32> to vector<16x1xf32>
    %cst_15 = arith.constant 1.000000e+00 : f32
    %22 = vector.broadcast %cst_15 : f32 to vector<16x1xf32>
    %23 = arith.maximumf %21, %22 : vector<16x1xf32>
    %24 = tpu.reciprocal %23 {approx = true} : vector<16x1xf32> -> vector<16x1xf32>
    %25 = vector.broadcast %24 : vector<16x1xf32> to vector<16x128xf32>
    %26 = arith.mulf %18, %25 : vector<16x128xf32>
    %27 = tpu.concatenate %26, %7 in 1 : vector<16x128xf32>, vector<16x128xf32> -> vector<16x256xf32>
    %28 = arith.truncf %27 : vector<16x256xf32> to vector<16x256xbf16>
    %c0_16 = arith.constant 0 : index
    %c0_17 = arith.constant 0 : index
    %29 = vector.load %arg6[%c0_16, %c0_17] : memref<256x128xbf16, #tpu.memory_space<vmem>>, vector<256x128xbf16>
    %cst_18 = arith.constant dense<0.000000e+00> : vector<16x128xf32>
    %30 = tpu.matmul %28, %29, %cst_18 {dimension_numbers = #tpu.dot_dimension_numbers<[1], [0], [0], [1], [0, 0, 1, 1], [], []>} : vector<16x256xbf16>, vector<256x128xbf16>, vector<16x128xf32> -> vector<16x128xf32>
    %c0_19 = arith.constant 0 : index
    %c0_20 = arith.constant 0 : index
    %31 = vector.load %arg7[%c0_19, %c0_20] : memref<1x128xf32, #tpu.memory_space<vmem>>, vector<1x128xf32>
    %32 = vector.broadcast %31 : vector<1x128xf32> to vector<16x128xf32>
    %33 = arith.addf %30, %32 : vector<16x128xf32>
    %cst_21 = arith.constant 0.000000e+00 : f32
    %34 = vector.broadcast %cst_21 : f32 to vector<16x128xf32>
    %35 = arith.maximumf %33, %34 : vector<16x128xf32>
    %36 = arith.mulf %35, %35 : vector<16x128xf32>
    %cst_22 = arith.constant dense<0.000000e+00> : vector<16xf32>
    %37 = vector.multi_reduction <add>, %36, %cst_22 [1] : vector<16x128xf32> to vector<16xf32>
    %38 = vector.shape_cast %37 : vector<16xf32> to vector<16x1xf32>
    %cst_23 = arith.constant 0.000000e+00 : f32
    %39 = vector.broadcast %cst_23 : f32 to vector<16x1xf32>
    %40 = arith.cmpf oeq, %38, %39 : vector<16x1xf32>
    %41 = math.rsqrt %38 : vector<16x1xf32>
    %cst_24 = arith.constant 1.000000e+00 : f32
    %42 = vector.broadcast %cst_24 : f32 to vector<16x1xf32>
    %43 = arith.select %40, %42, %41 : vector<16x1xi1>, vector<16x1xf32>
    %44 = vector.broadcast %43 : vector<16x1xf32> to vector<16x128xf32>
    %45 = arith.mulf %35, %44 : vector<16x128xf32>
    %46 = vector.extract_strided_slice %45 {offsets = [0, 0], sizes = [8, 128], strides = [1, 1]} : vector<16x128xf32> to vector<8x128xf32>
    %47 = arith.truncf %45 : vector<16x128xf32> to vector<16x128xbf16>
    %c0_25 = arith.constant 0 : index
    %c0_26 = arith.constant 0 : index
    %48 = vector.load %arg9[%c0_25, %c0_26] : memref<128x128xbf16, #tpu.memory_space<vmem>>, vector<128x128xbf16>
    %cst_27 = arith.constant dense<0.000000e+00> : vector<16x128xf32>
    %49 = tpu.matmul %47, %48, %cst_27 {dimension_numbers = #tpu.dot_dimension_numbers<[1], [0], [0], [1], [0, 0, 1, 1], [], []>} : vector<16x128xbf16>, vector<128x128xbf16>, vector<16x128xf32> -> vector<16x128xf32>
    %c0_28 = arith.constant 0 : index
    %c0_29 = arith.constant 0 : index
    %50 = vector.load %arg10[%c0_28, %c0_29] : memref<1x128xf32, #tpu.memory_space<vmem>>, vector<1x128xf32>
    %51 = vector.broadcast %50 : vector<1x128xf32> to vector<16x128xf32>
    %52 = arith.addf %49, %51 : vector<16x128xf32>
    %cst_30 = arith.constant 0.000000e+00 : f32
    %53 = vector.broadcast %cst_30 : f32 to vector<16x128xf32>
    %54 = arith.maximumf %52, %53 : vector<16x128xf32>
    %c0_31 = arith.constant 0 : index
    %c0_32 = arith.constant 0 : index
    %55 = vector.load %arg8[%c0_31, %c0_32] : memref<8x16xbf16, #tpu.memory_space<vmem>>, vector<8x16xbf16>
    %56 = arith.truncf %54 : vector<16x128xf32> to vector<16x128xbf16>
    %cst_33 = arith.constant dense<0.000000e+00> : vector<8x128xf32>
    %57 = tpu.matmul %55, %56, %cst_33 {dimension_numbers = #tpu.dot_dimension_numbers<[1], [0], [0], [1], [0, 0, 1, 1], [], []>} : vector<8x16xbf16>, vector<16x128xbf16>, vector<8x128xf32> -> vector<8x128xf32>
    %58 = arith.extf %55 : vector<8x16xbf16> to vector<8x16xf32>
    %cst_34 = arith.constant dense<0.000000e+00> : vector<8xf32>
    %59 = vector.multi_reduction <add>, %58, %cst_34 [1] : vector<8x16xf32> to vector<8xf32>
    %60 = vector.shape_cast %59 : vector<8xf32> to vector<8x1xf32>
    %cst_35 = arith.constant 1.000000e+00 : f32
    %61 = vector.broadcast %cst_35 : f32 to vector<8x1xf32>
    %62 = arith.maximumf %60, %61 : vector<8x1xf32>
    %63 = tpu.reciprocal %62 {approx = true} : vector<8x1xf32> -> vector<8x1xf32>
    %64 = vector.broadcast %63 : vector<8x1xf32> to vector<8x128xf32>
    %65 = arith.mulf %57, %64 : vector<8x128xf32>
    %66 = tpu.concatenate %65, %46 in 1 : vector<8x128xf32>, vector<8x128xf32> -> vector<8x256xf32>
    %67 = arith.truncf %66 : vector<8x256xf32> to vector<8x256xbf16>
    %c0_36 = arith.constant 0 : index
    %c0_37 = arith.constant 0 : index
    %68 = vector.load %arg11[%c0_36, %c0_37] : memref<256x128xbf16, #tpu.memory_space<vmem>>, vector<256x128xbf16>
    %cst_38 = arith.constant dense<0.000000e+00> : vector<8x128xf32>
    %69 = tpu.matmul %67, %68, %cst_38 {dimension_numbers = #tpu.dot_dimension_numbers<[1], [0], [0], [1], [0, 0, 1, 1], [], []>} : vector<8x256xbf16>, vector<256x128xbf16>, vector<8x128xf32> -> vector<8x128xf32>
    %c0_39 = arith.constant 0 : index
    %c0_40 = arith.constant 0 : index
    %70 = vector.load %arg12[%c0_39, %c0_40] : memref<1x128xf32, #tpu.memory_space<vmem>>, vector<1x128xf32>
    %71 = vector.broadcast %70 : vector<1x128xf32> to vector<8x128xf32>
    %72 = arith.addf %69, %71 : vector<8x128xf32>
    %cst_41 = arith.constant 0.000000e+00 : f32
    %73 = vector.broadcast %cst_41 : f32 to vector<8x128xf32>
    %74 = arith.maximumf %72, %73 : vector<8x128xf32>
    %75 = arith.mulf %74, %74 : vector<8x128xf32>
    %cst_42 = arith.constant dense<0.000000e+00> : vector<8xf32>
    %76 = vector.multi_reduction <add>, %75, %cst_42 [1] : vector<8x128xf32> to vector<8xf32>
    %77 = vector.shape_cast %76 : vector<8xf32> to vector<8x1xf32>
    %cst_43 = arith.constant 0.000000e+00 : f32
    %78 = vector.broadcast %cst_43 : f32 to vector<8x1xf32>
    %79 = arith.cmpf oeq, %77, %78 : vector<8x1xf32>
    %80 = math.rsqrt %77 : vector<8x1xf32>
    %cst_44 = arith.constant 1.000000e+00 : f32
    %81 = vector.broadcast %cst_44 : f32 to vector<8x1xf32>
    %82 = arith.select %79, %81, %80 : vector<8x1xi1>, vector<8x1xf32>
    %83 = vector.broadcast %82 : vector<8x1xf32> to vector<8x128xf32>
    %84 = arith.mulf %74, %83 : vector<8x128xf32>
    %85 = arith.addf %6, %84 : vector<8x128xf32>
    %c0_45 = arith.constant 0 : index
    %c0_46 = arith.constant 0 : index
    %86 = vector.load %arg13[%c0_45, %c0_46] : memref<512x8xf32, #tpu.memory_space<vmem>>, vector<512x8xf32>
    %cst_47 = arith.constant dense<0.000000e+00> : vector<512x128xf32>
    %87 = tpu.matmul %86, %85, %cst_47 {dimension_numbers = #tpu.dot_dimension_numbers<[1], [0], [0], [1], [0, 0, 1, 1], [], []>} : vector<512x8xf32>, vector<8x128xf32>, vector<512x128xf32> -> vector<512x128xf32>
    %88 = vector.extract_strided_slice %87 {offsets = [0, 0], sizes = [128, 128], strides = [1, 1]} : vector<512x128xf32> to vector<128x128xf32>
    %89 = vector.extract_strided_slice %87 {offsets = [128, 0], sizes = [128, 128], strides = [1, 1]} : vector<512x128xf32> to vector<128x128xf32>
    %90 = vector.extract_strided_slice %87 {offsets = [256, 0], sizes = [128, 128], strides = [1, 1]} : vector<512x128xf32> to vector<128x128xf32>
    %91 = vector.extract_strided_slice %87 {offsets = [384, 0], sizes = [128, 128], strides = [1, 1]} : vector<512x128xf32> to vector<128x128xf32>
    %92 = arith.mulf %90, %91 : vector<128x128xf32>
    %93 = arith.mulf %88, %89 : vector<128x128xf32>
    %94 = arith.subf %92, %93 : vector<128x128xf32>
    %cst_48 = arith.constant dense<0.000000e+00> : vector<128xf32>
    %95 = vector.multi_reduction <add>, %94, %cst_48 [1] : vector<128x128xf32> to vector<128xf32>
    %96 = vector.shape_cast %95 : vector<128xf32> to vector<1x128xf32>
    %c0_49 = arith.constant 0 : index
    %c0_50 = arith.constant 0 : index
    %97 = vector.load %arg14[%c0_49, %c0_50] : memref<1x128xf32, #tpu.memory_space<vmem>>, vector<1x128xf32>
    %98 = arith.addf %96, %97 : vector<1x128xf32>
    %cst_51 = arith.constant 1.000000e+00 : f32
    %99 = vector.broadcast %cst_51 : f32 to vector<1x128xf32>
    %100 = arith.addf %98, %99 : vector<1x128xf32>
    %cst_52 = arith.constant 0.000000e+00 : f32
    %101 = vector.broadcast %cst_52 : f32 to vector<1x128xf32>
    %102 = arith.maximumf %100, %101 : vector<1x128xf32>
    %c0_53 = arith.constant 0 : index
    %c0_54 = arith.constant 0 : index
    %103 = vector.load %arg15[%c0_53, %c0_54] : memref<1x128xf32, #tpu.memory_space<vmem>>, vector<1x128xf32>
    tpu.vector_store %arg15[%c0_53, %c0_54], %102 {strides = array<i32>} : memref<1x128xf32, #tpu.memory_space<vmem>>, vector<1x128xf32>,
    return
  }
}

</mosaic_0001>

<llo_original>
// kernel: tpu_custom_call.1
$region0: #{tpu_custom_call.1}
  #allocation0 [shape = 'u32[]', space=smem, size = 0x4, offset = 0x4, fixed_abs, tag = 'smem constant byte address 0x4 - core index']
  #allocation1 [shape = 'u32[144,128]{1,0:T(1,128)}', space=vmem, size = 0x12000, scoped, tag = 'internal scratch']
  %s0 = inlined_call_operand.vmem [shape: bf16[32,128], index: 0, kind: input, shape index: {}]
  %s1 = inlined_call_operand.vmem [shape: bf16[128,128], index: 1, kind: input, shape index: {}]
  %s2 = inlined_call_operand.vmem [shape: f32[1,128], index: 2, kind: input, shape index: {}]
  %s3 = inlined_call_operand.vmem [shape: bf16[16,32], index: 3, kind: input, shape index: {}]
  %s4 = inlined_call_operand.vmem [shape: bf16[128,128], index: 4, kind: input, shape index: {}]
  %s5 = inlined_call_operand.vmem [shape: f32[1,128], index: 5, kind: input, shape index: {}]
  %s6 = inlined_call_operand.vmem [shape: bf16[256,128], index: 6, kind: input, shape index: {}]
  %s7 = inlined_call_operand.vmem [shape: f32[1,128], index: 7, kind: input, shape index: {}]
  %s8 = inlined_call_operand.vmem [shape: bf16[8,16], index: 8, kind: input, shape index: {}]
  %s9 = inlined_call_operand.vmem [shape: bf16[128,128], index: 9, kind: input, shape index: {}]
  %s10 = inlined_call_operand.vmem [shape: f32[1,128], index: 10, kind: input, shape index: {}]
  %s11 = inlined_call_operand.vmem [shape: bf16[256,128], index: 11, kind: input, shape index: {}]
  %s12 = inlined_call_operand.vmem [shape: f32[1,128], index: 12, kind: input, shape index: {}]
  %s13 = inlined_call_operand.vmem [shape: f32[512,8], index: 13, kind: input, shape index: {}]
  %s14 = inlined_call_operand.vmem [shape: f32[1,128], index: 14, kind: input, shape index: {}]
  %s15 = inlined_call_operand.hbm [shape: f32[1,128], index: 15, kind: output, shape index: {}]
  %s16 = sld [smem:[#allocation0]]
  $region70: #{tpu_custom_call.1} parent=0
    _
  %s18 = ssub.s32 1, %s16
  %s19 = scalar_select 0, %s18, %s16
  $region1: #{tpu_custom_call.1} parent=0
    #allocation2 [shape = 'u8[512]{0}', space=vmem, size = 0x400, scoped, tag = 'output window, operand 0, single buffered']
    #allocation3 [shape = 's32[1]{0}', space=sflag, size = 0x4, scoped, tag = 'scoped memory for tpu_custom_call.1']
    %20 = vsyncpa [#allocation3], 0
    // Predicated region
    $region2: #{tpu_custom_call.1} parent=1 // pred_check
      _
    $region3: #{tpu_custom_call.1} parent=1 // pred_check_branch
      %22 = sbr.rel (0) target = $region5
    $region4: #{tpu_custom_call.1} parent=1 // pred_region
      _
    $region5: #{tpu_custom_call.1} parent=1 // pred_fallthru
      _
    // Predicated region
    $region6: #{tpu_custom_call.1} parent=1 // pred_check
      _
    $region7: #{tpu_custom_call.1} parent=1 // pred_check_branch
      %24 = sbr.rel (0) target = $region9
    $region8: #{tpu_custom_call.1} parent=1 // pred_region
      _
    $region9: #{tpu_custom_call.1} parent=1 // pred_fallthru
      _
    // Predicated region
    $region10: #{tpu_custom_call.1} parent=1 // pred_check
      _
    $region11: #{tpu_custom_call.1} parent=1 // pred_check_branch
      %26 = sbr.rel (0) target = $region13
    $region12: #{tpu_custom_call.1} parent=1 // pred_region
      _
    $region13: #{tpu_custom_call.1} parent=1 // pred_fallthru
      _
    // Predicated region
    $region14: #{tpu_custom_call.1} parent=1 // pred_check
      _
    $region15: #{tpu_custom_call.1} parent=1 // pred_check_branch
      %28 = sbr.rel (0) target = $region17
    $region16: #{tpu_custom_call.1} parent=1 // pred_region
      _
    $region17: #{tpu_custom_call.1} parent=1 // pred_fallthru
      _
    // Predicated region
    $region18: #{tpu_custom_call.1} parent=1 // pred_check
      _
    $region19: #{tpu_custom_call.1} parent=1 // pred_check_branch
      %30 = sbr.rel (0) target = $region21
    $region20: #{tpu_custom_call.1} parent=1 // pred_region
      _
    $region21: #{tpu_custom_call.1} parent=1 // pred_fallthru
      _
    // Predicated region
    $region22: #{tpu_custom_call.1} parent=1 // pred_check
      _
    $region23: #{tpu_custom_call.1} parent=1 // pred_check_branch
      %32 = sbr.rel (0) target = $region25
    $region24: #{tpu_custom_call.1} parent=1 // pred_region
      _
    $region25: #{tpu_custom_call.1} parent=1 // pred_fallthru
      _
    // Predicated region
    $region26: #{tpu_custom_call.1} parent=1 // pred_check
      _
    $region27: #{tpu_custom_call.1} parent=1 // pred_check_branch
      %34 = sbr.rel (0) target = $region29
    $region28: #{tpu_custom_call.1} parent=1 // pred_region
      _
    $region29: #{tpu_custom_call.1} parent=1 // pred_fallthru
      _
    // Predicated region
    $region30: #{tpu_custom_call.1} parent=1 // pred_check
      _
    $region31: #{tpu_custom_call.1} parent=1 // pred_check_branch
      %36 = sbr.rel (0) target = $region33
    $region32: #{tpu_custom_call.1} parent=1 // pred_region
      _
    $region33: #{tpu_custom_call.1} parent=1 // pred_fallthru
      _
    // Predicated region
    $region34: #{tpu_custom_call.1} parent=1 // pred_check
      _
    $region35: #{tpu_custom_call.1} parent=1 // pred_check_branch
      %38 = sbr.rel (0) target = $region37
    $region36: #{tpu_custom_call.1} parent=1 // pred_region
      _
    $region37: #{tpu_custom_call.1} parent=1 // pred_fallthru
      _
    // Predicated region
    $region38: #{tpu_custom_call.1} parent=1 // pred_check
      _
    $region39: #{tpu_custom_call.1} parent=1 // pred_check_branch
      %40 = sbr.rel (0) target = $region41
    $region40: #{tpu_custom_call.1} parent=1 // pred_region
      _
    $region41: #{tpu_custom_call.1} parent=1 // pred_fallthru
      _
    // Predicated region
    $region42: #{tpu_custom_call.1} parent=1 // pred_check
      _
    $region43: #{tpu_custom_call.1} parent=1 // pred_check_branch
      %42 = sbr.rel (0) target = $region45
    $region44: #{tpu_custom_call.1} parent=1 // pred_region
      _
    $region45: #{tpu_custom_call.1} parent=1 // pred_fallthru
      _
    // Predicated region
    $region46: #{tpu_custom_call.1} parent=1 // pred_check
      _
    $region47: #{tpu_custom_call.1} parent=1 // pred_check_branch
      %44 = sbr.rel (0) target = $region49
    $region48: #{tpu_custom_call.1} parent=1 // pred_region
      _
    $region49: #{tpu_custom_call.1} parent=1 // pred_fallthru
      _
    // Predicated region
    $region50: #{tpu_custom_call.1} parent=1 // pred_check
      _
    $region51: #{tpu_custom_call.1} parent=1 // pred_check_branch
      %46 = sbr.rel (0) target = $region53
    $region52: #{tpu_custom_call.1} parent=1 // pred_region
      _
    $region53: #{tpu_custom_call.1} parent=1 // pred_fallthru
      _
    // Predicated region
    $region54: #{tpu_custom_call.1} parent=1 // pred_check
      _
    $region55: #{tpu_custom_call.1} parent=1 // pred_check_branch
      %48 = sbr.rel (0) target = $region57
    $region56: #{tpu_custom_call.1} parent=1 // pred_region
      _
    $region57: #{tpu_custom_call.1} parent=1 // pred_fallthru
      _
    // Predicated region
    $region58: #{tpu_custom_call.1} parent=1 // pred_check
      _
    $region59: #{tpu_custom_call.1} parent=1 // pred_check_branch
      %50 = sbr.rel (0) target = $region61
    $region60: #{tpu_custom_call.1} parent=1 // pred_region
      _
    $region61: #{tpu_custom_call.1} parent=1 // pred_fallthru
      _
    %v52 = vld [vmem:[%s0] sm:$0xf]
    %v53 = vld [vmem:[%s0 + $0x4] sm:$0xf]
    %v54 = vld [vmem:[%s0 + $0x8] sm:$0xf]
    %v55 = vld [vmem:[%s0 + $0xc] sm:$0xf]
    %v56 = vld [vmem:[%s1] sm:$0xf]
    %v57 = vld [vmem:[%s1 + $0x4] sm:$0xf]
    %v58 = vld [vmem:[%s1 + $0x8] sm:$0xf]
    %v59 = vld [vmem:[%s1 + $0xc] sm:$0xf]
    %v60 = vld [vmem:[%s1 + $0x10] sm:$0xf]
    %v61 = vld [vmem:[%s1 + $0x14] sm:$0xf]
    %v62 = vld [vmem:[%s1 + $0x18] sm:$0xf]
    %v63 = vld [vmem:[%s1 + $0x1c] sm:$0xf]
    %v64 = vld [vmem:[%s1 + $0x20] sm:$0xf]
    %v65 = vld [vmem:[%s1 + $0x24] sm:$0xf]
    %v66 = vld [vmem:[%s1 + $0x28] sm:$0xf]
    %v67 = vld [vmem:[%s1 + $0x2c] sm:$0xf]
    %v68 = vld [vmem:[%s1 + $0x30] sm:$0xf]
    %v69 = vld [vmem:[%s1 + $0x34] sm:$0xf]
    %v70 = vld [vmem:[%s1 + $0x38] sm:$0xf]
    %v71 = vld [vmem:[%s1 + $0x3c] sm:$0xf]
    %v72 = vld [vmem:[%s2] sm:$0x1]
    %v74 = vlaneseq
    %v75 = vshrl.u32 %v74, 7
    %v76 = vsub.s32 0, %v75
    %v77 = vrot.slane %v72, %v76
    %v83 = vunpack.c.l.b16 %v52
    %v84 = vunpack.c.l.b16 %v53
    %v85 = vunpack.c.l.b16 %v54
    %v86 = vunpack.c.l.b16 %v55
    %v87 = vpack.c.b16 %v84, %v83
    %v88 = vpack.c.b16 %v86, %v85
    %v107 = vunpack.c.l.b16 %v56
    %v108 = vunpack.c.l.b16 %v57
    %v109 = vunpack.c.l.b16 %v58
    %v110 = vunpack.c.l.b16 %v59
    %v111 = vunpack.c.l.b16 %v60
    %v112 = vunpack.c.l.b16 %v61
    %v113 = vunpack.c.l.b16 %v62
    %v114 = vunpack.c.l.b16 %v63
    %v115 = vunpack.c.l.b16 %v64
    %v116 = vunpack.c.l.b16 %v65
    %v117 = vunpack.c.l.b16 %v66
    %v118 = vunpack.c.l.b16 %v67
    %v119 = vunpack.c.l.b16 %v68
    %v120 = vunpack.c.l.b16 %v69
    %v121 = vunpack.c.l.b16 %v70
    %v122 = vunpack.c.l.b16 %v71
    %v123 = vpack.c.b16 %v108, %v107
    %v124 = vpack.c.b16 %v110, %v109
    %v125 = vpack.c.b16 %v112, %v111
    %v126 = vpack.c.b16 %v114, %v113
    %v127 = vpack.c.b16 %v116, %v115
    %v128 = vpack.c.b16 %v118, %v117
    %v129 = vpack.c.b16 %v120, %v119
    %v130 = vpack.c.b16 %v122, %v121
    %139 = vmatprep.subr.bf16.mxu0 0
    %140 = vmatpush1.bf16.msra.mxu0 %v130
    %141 = vmatprep.subr.bf16.mxu0 0
    %142 = vmatpush1.bf16.msra.mxu0 %v129
    %143 = vmatprep.subr.bf16.mxu0 0
    %144 = vmatpush1.bf16.msra.mxu0 %v128
    %145 = vmatprep.subr.bf16.mxu0 0
    %146 = vmatpush1.bf16.msra.mxu0 %v127
    %147 = vmatprep.subr.bf16.mxu0 0
    %148 = vmatpush1.bf16.msra.mxu0 %v126
    %149 = vmatprep.subr.bf16.mxu0 0
    %150 = vmatpush1.bf16.msra.mxu0 %v125
    %151 = vmatprep.subr.bf16.mxu0 0
    %152 = vmatpush1.bf16.msra.mxu0 %v124
    %153 = vmatprep.subr.bf16.mxu0 0
    %154 = vmatpush1.bf16.msra.mxu0 %v123
    %155 = vmatprep.subr.bf16.mxu0 0
    %156 = vmatpush2.bf16.msra.mxu0 0
    %157 = vmatprep.subr.bf16.mxu0 0
    %158 = vmatpush2.bf16.msra.mxu0 0
    %159 = vmatprep.subr.bf16.mxu0 0
    %160 = vmatpush2.bf16.msra.mxu0 0
    %161 = vmatprep.subr.bf16.mxu0 0
    %162 = vmatpush2.bf16.msra.mxu0 0
    %163 = vmatprep.subr.bf16.mxu0 0
    %164 = vmatpush2.bf16.msra.mxu0 0
    %165 = vmatprep.subr.bf16.mxu0 0
    %166 = vmatpush2.bf16.msra.mxu0 0
    %167 = vmatprep.subr.bf16.mxu0 0
    %168 = vmatpush2.bf16.msra.mxu0 0
    %169 = vmatprep.subr.bf16.mxu0 0
    %170 = vmatpush2.bf16.msra.mxu0 0
    %171 = vmatprep.mubr.bf16.mxu0 0
    %172 = vmatmul.mubr.bf16.gmra.mxu0 %v87
    %v173 = vpop.f32.mrf.mxu0
    %v174 = vadd.f32 %v77, %v173
    %v175 = vpop.f32.mrf.mxu0
    %v176 = vpop.f32.mrf.mxu0
    %v177 = vadd.f32 %v77, %v176
    %v178 = vpop.f32.mrf.mxu0
    %179 = vmatprep.mubr.bf16.mxu0 0
    %180 = vmatmul.mubr.bf16.gmra.mxu0 %v88
    %v181 = vpop.f32.mrf.mxu0
    %v182 = vadd.f32 %v77, %v181
    %v183 = vpop.f32.mrf.mxu0
    %v184 = vpop.f32.mrf.mxu0
    %v185 = vadd.f32 %v77, %v184
    %v186 = vpop.f32.mrf.mxu0
    %187 = vdwg.mxu0
    %v188 = vpack.c.bf16 %v177, %v174
    %v189 = vpack.c.bf16 %v185, %v182
    %v190 = vld [vmem:[%s4] sm:$0xf]
    %v191 = vld [vmem:[%s4 + $0x4] sm:$0xf]
    %v192 = vld [vmem:[%s4 + $0x8] sm:$0xf]
    %v193 = vld [vmem:[%s4 + $0xc] sm:$0xf]
    %v194 = vld [vmem:[%s4 + $0x10] sm:$0xf]
    %v195 = vld [vmem:[%s4 + $0x14] sm:$0xf]
    %v196 = vld [vmem:[%s4 + $0x18] sm:$0xf]
    %v197 = vld [vmem:[%s4 + $0x1c] sm:$0xf]
    %v198 = vld [vmem:[%s4 + $0x20] sm:$0xf]
    %v199 = vld [vmem:[%s4 + $0x24] sm:$0xf]
    %v200 = vld [vmem:[%s4 + $0x28] sm:$0xf]
    %v201 = vld [vmem:[%s4 + $0x2c] sm:$0xf]
    %v202 = vld [vmem:[%s4 + $0x30] sm:$0xf]
    %v203 = vld [vmem:[%s4 + $0x34] sm:$0xf]
    %v204 = vld [vmem:[%s4 + $0x38] sm:$0xf]
    %v205 = vld [vmem:[%s4 + $0x3c] sm:$0xf]
    %v206 = vld [vmem:[%s5] sm:$0x1]
    %v208 = vlaneseq
    %v209 = vshrl.u32 %v208, 7
    %v210 = vsub.s32 0, %v209
    %v211 = vrot.slane %v206, %v210
    %v229 = vunpack.c.l.b16 %v190
    %v230 = vunpack.c.l.b16 %v191
    %v231 = vunpack.c.l.b16 %v192
    %v232 = vunpack.c.l.b16 %v193
    %v233 = vunpack.c.l.b16 %v194
    %v234 = vunpack.c.l.b16 %v195
    %v235 = vunpack.c.l.b16 %v196
    %v236 = vunpack.c.l.b16 %v197
    %v237 = vunpack.c.l.b16 %v198
    %v238 = vunpack.c.l.b16 %v199
    %v239 = vunpack.c.l.b16 %v200
    %v240 = vunpack.c.l.b16 %v201
    %v241 = vunpack.c.l.b16 %v202
    %v242 = vunpack.c.l.b16 %v203
    %v243 = vunpack.c.l.b16 %v204
    %v244 = vunpack.c.l.b16 %v205
    %v245 = vpack.c.b16 %v230, %v229
    %v246 = vpack.c.b16 %v232, %v231
    %v247 = vpack.c.b16 %v234, %v233
    %v248 = vpack.c.b16 %v236, %v235
    %v249 = vpack.c.b16 %v238, %v237
    %v250 = vpack.c.b16 %v240, %v239
    %v251 = vpack.c.b16 %v242, %v241
    %v252 = vpack.c.b16 %v244, %v243
    %261 = vmatprep.subr.bf16.mxu0 0
    %262 = vmatpush1.bf16.msra.mxu0 %v252
    %263 = vmatprep.subr.bf16.mxu0 0
    %264 = vmatpush1.bf16.msra.mxu0 %v251
    %265 = vmatprep.subr.bf16.mxu0 0
    %266 = vmatpush1.bf16.msra.mxu0 %v250
    %267 = vmatprep.subr.bf16.mxu0 0
    %268 = vmatpush1.bf16.msra.mxu0 %v249
    %269 = vmatprep.subr.bf16.mxu0 0
    %270 = vmatpush1.bf16.msra.mxu0 %v248
    %271 = vmatprep.subr.bf16.mxu0 0
    %272 = vmatpush1.bf16.msra.mxu0 %v247
    %273 = vmatprep.subr.bf16.mxu0 0
    %274 = vmatpush1.bf16.msra.mxu0 %v246
    %275 = vmatprep.subr.bf16.mxu0 0
    %276 = vmatpush1.bf16.msra.mxu0 %v245
    %277 = vmatprep.subr.bf16.mxu0 0
    %278 = vmatpush2.bf16.msra.mxu0 0
    %279 = vmatprep.subr.bf16.mxu0 0
    %280 = vmatpush2.bf16.msra.mxu0 0
    %281 = vmatprep.subr.bf16.mxu0 0
    %282 = vmatpush2.bf16.msra.mxu0 0
    %283 = vmatprep.subr.bf16.mxu0 0
    %284 = vmatpush2.bf16.msra.mxu0 0
    %285 = vmatprep.subr.bf16.mxu0 0
    %286 = vmatpush2.bf16.msra.mxu0 0
    %287 = vmatprep.subr.bf16.mxu0 0
    %288 = vmatpush2.bf16.msra.mxu0 0
    %289 = vmatprep.subr.bf16.mxu0 0
    %290 = vmatpush2.bf16.msra.mxu0 0
    %291 = vmatprep.subr.bf16.mxu0 0
    %292 = vmatpush2.bf16.msra.mxu0 0
    %293 = vmatprep.mubr.bf16.mxu0 0
    %294 = vmatmul.mubr.bf16.gmra.mxu0 %v188
    %v295 = vpop.f32.mrf.mxu0
    %v296 = vadd.f32 %v211, %v295
    %v297 = vpop.f32.mrf.mxu0
    %v298 = vpop.f32.mrf.mxu0
    %v299 = vadd.f32 %v211, %v298
    %v300 = vpop.f32.mrf.mxu0
    %301 = vmatprep.mubr.bf16.mxu0 0
    %302 = vmatmul.mubr.bf16.gmra.mxu0 %v189
    %v303 = vpop.f32.mrf.mxu0
    %v304 = vadd.f32 %v211, %v303
    %v305 = vpop.f32.mrf.mxu0
    %v306 = vpop.f32.mrf.mxu0
    %v307 = vadd.f32 %v211, %v306
    %v308 = vpop.f32.mrf.mxu0
    %309 = vdwg.mxu0
    %v310 = vmax.f32 %v296, 0.0
    %v311 = vmax.f32 %v299, 0.0
    %v312 = vmax.f32 %v304, 0.0
    %v313 = vmax.f32 %v307, 0.0
    %v314 = vld [vmem:[%s3] sm:$0xf]
    %v315 = vld [vmem:[%s3 + $0x4] sm:$0xf]
    %v316 = vpack.c.bf16 %v311, %v310
    %v317 = vpack.c.bf16 %v313, %v312
    %v320 = vunpack.c.l.b16 %v314
    %v321 = vunpack.c.l.b16 %v315
    %v322 = vpack.c.b16 %v321, %v320
    %vm323 = vcmask 261120
    %v325 = vsel %vm323, %v322, 0
    %327 = vmatprep.subr.bf16.mxu0 0
    %328 = vmatpush1.bf16.msra.mxu0 0
    %329 = vmatprep.subr.bf16.mxu0 0
    %330 = vmatpush1.bf16.msra.mxu0 0
    %331 = vmatprep.subr.bf16.mxu0 0
    %332 = vmatpush1.bf16.msra.mxu0 0
    %333 = vmatprep.subr.bf16.mxu0 0
    %334 = vmatpush1.bf16.msra.mxu0 0
    %335 = vmatprep.subr.bf16.mxu0 0
    %336 = vmatpush1.bf16.msra.mxu0 0
    %337 = vmatprep.subr.bf16.mxu0 0
    %338 = vmatpush1.bf16.msra.mxu0 0
    %339 = vmatprep.subr.bf16.mxu0 0
    %340 = vmatpush1.bf16.msra.mxu0 %v317
    %341 = vmatprep.subr.bf16.mxu0 0
    %342 = vmatpush1.bf16.msra.mxu0 %v316
    %343 = vmatprep.subr.bf16.mxu0 0
    %344 = vmatpush2.bf16.msra.mxu0 0
    %345 = vmatprep.subr.bf16.mxu0 0
    %346 = vmatpush2.bf16.msra.mxu0 0
    %347 = vmatprep.subr.bf16.mxu0 0
    %348 = vmatpush2.bf16.msra.mxu0 0
    %349 = vmatprep.subr.bf16.mxu0 0
    %350 = vmatpush2.bf16.msra.mxu0 0
    %351 = vmatprep.subr.bf16.mxu0 0
    %352 = vmatpush2.bf16.msra.mxu0 0
    %353 = vmatprep.subr.bf16.mxu0 0
    %354 = vmatpush2.bf16.msra.mxu0 0
    %355 = vmatprep.subr.bf16.mxu0 0
    %356 = vmatpush2.bf16.msra.mxu0 0
    %357 = vmatprep.subr.bf16.mxu0 0
    %358 = vmatpush2.bf16.msra.mxu0 0
    %359 = vmatprep.mubr.bf16.mxu0 0
    %360 = vmatmul.mubr.bf16.gmra.mxu0 %v325
    %v361 = vpop.f32.mrf.mxu0
    %v362 = vadd.f32 0.0, %v361
    %v363 = vpop.f32.mrf.mxu0
    %v364 = vpop.f32.mrf.mxu0
    %v365 = vadd.f32 0.0, %v364
    %v366 = vpop.f32.mrf.mxu0
    %367 = vdwg.mxu0
    %v368 = vunpack.c.l.bf16 %v314
    %v369 = vunpack.c.l.bf16 %v315
    %v370 = vsel %vm323, %v368, 0.0
    %371 = vadd.xlane.f32.xlu0 %v370
    %v372 = vpop.xlane.xlu0 %371
    %v373 = vsel %vm323, %v369, 0.0
    %374 = vadd.xlane.f32.xlu0 %v373
    %v375 = vpop.xlane.xlu0 %374
    %v376 = vmax.f32 %v372, 1.0
    %v377 = vmax.f32 %v375, 1.0
    %v378 = vrcp.pop %v376
    %v379 = vrcp.pop %v377
    %v380 = vmul.f32 %v362, %v378
    %v381 = vmul.f32 %v365, %v379
    %v382 = vpack.c.bf16 %v381, %v380
    %v383 = vld [vmem:[%s6] sm:$0xf]
    %v384 = vld [vmem:[%s6 + $0x4] sm:$0xf]
    %v385 = vld [vmem:[%s6 + $0x8] sm:$0xf]
    %v386 = vld [vmem:[%s6 + $0xc] sm:$0xf]
    %v387 = vld [vmem:[%s6 + $0x10] sm:$0xf]
    %v388 = vld [vmem:[%s6 + $0x14] sm:$0xf]
    %v389 = vld [vmem:[%s6 + $0x18] sm:$0xf]
    %v390 = vld [vmem:[%s6 + $0x1c] sm:$0xf]
    %v391 = vld [vmem:[%s6 + $0x20] sm:$0xf]
    %v392 = vld [vmem:[%s6 + $0x24] sm:$0xf]
    %v393 = vld [vmem:[%s6 + $0x28] sm:$0xf]
    %v394 = vld [vmem:[%s6 + $0x2c] sm:$0xf]
    %v395 = vld [vmem:[%s6 + $0x30] sm:$0xf]
    %v396 = vld [vmem:[%s6 + $0x34] sm:$0xf]
    %v397 = vld [vmem:[%s6 + $0x38] sm:$0xf]
    %v398 = vld [vmem:[%s6 + $0x3c] sm:$0xf]
    %v399 = vld [vmem:[%s6 + $0x40] sm:$0xf]
    %v400 = vld [vmem:[%s6 + $0x44] sm:$0xf]
    %v401 = vld [vmem:[%s6 + $0x48] sm:$0xf]
    %v402 = vld [vmem:[%s6 + $0x4c] sm:$0xf]
    %v403 = vld [vmem:[%s6 + $0x50] sm:$0xf]
    %v404 = vld [vmem:[%s6 + $0x54] sm:$0xf]
    %v405 = vld [vmem:[%s6 + $0x58] sm:$0xf]
    %v406 = vld [vmem:[%s6 + $0x5c] sm:$0xf]
    %v407 = vld [vmem:[%s6 + $0x60] sm:$0xf]
    %v408 = vld [vmem:[%s6 + $0x64] sm:$0xf]
    %v409 = vld [vmem:[%s6 + $0x68] sm:$0xf]
    %v410 = vld [vmem:[%s6 + $0x6c] sm:$0xf]
    %v411 = vld [vmem:[%s6 + $0x70] sm:$0xf]
    %v412 = vld [vmem:[%s6 + $0x74] sm:$0xf]
    %v413 = vld [vmem:[%s6 + $0x78] sm:$0xf]
    %v414 = vld [vmem:[%s6 + $0x7c] sm:$0xf]
    %v415 = vld [vmem:[%s7] sm:$0x1]
    %v417 = vlaneseq
    %v418 = vshrl.u32 %v417, 7
    %v419 = vsub.s32 0, %v418
    %v420 = vrot.slane %v415, %v419
    %v454 = vunpack.c.l.b16 %v383
    %v455 = vunpack.c.l.b16 %v384
    %v456 = vunpack.c.l.b16 %v385
    %v457 = vunpack.c.l.b16 %v386
    %v458 = vunpack.c.l.b16 %v387
    %v459 = vunpack.c.l.b16 %v388
    %v460 = vunpack.c.l.b16 %v389
    %v461 = vunpack.c.l.b16 %v390
    %v462 = vunpack.c.l.b16 %v391
    %v463 = vunpack.c.l.b16 %v392
    %v464 = vunpack.c.l.b16 %v393
    %v465 = vunpack.c.l.b16 %v394
    %v466 = vunpack.c.l.b16 %v395
    %v467 = vunpack.c.l.b16 %v396
    %v468 = vunpack.c.l.b16 %v397
    %v469 = vunpack.c.l.b16 %v398
    %v470 = vunpack.c.l.b16 %v399
    %v471 = vunpack.c.l.b16 %v400
    %v472 = vunpack.c.l.b16 %v401
    %v473 = vunpack.c.l.b16 %v402
    %v474 = vunpack.c.l.b16 %v403
    %v475 = vunpack.c.l.b16 %v404
    %v476 = vunpack.c.l.b16 %v405
    %v477 = vunpack.c.l.b16 %v406
    %v478 = vunpack.c.l.b16 %v407
    %v479 = vunpack.c.l.b16 %v408
    %v480 = vunpack.c.l.b16 %v409
    %v481 = vunpack.c.l.b16 %v410
    %v482 = vunpack.c.l.b16 %v411
    %v483 = vunpack.c.l.b16 %v412
    %v484 = vunpack.c.l.b16 %v413
    %v485 = vunpack.c.l.b16 %v414
    %v486 = vpack.c.b16 %v455, %v454
    %v487 = vpack.c.b16 %v457, %v456
    %v488 = vpack.c.b16 %v459, %v458
    %v489 = vpack.c.b16 %v461, %v460
    %v490 = vpack.c.b16 %v463, %v462
    %v491 = vpack.c.b16 %v465, %v464
    %v492 = vpack.c.b16 %v467, %v466
    %v493 = vpack.c.b16 %v469, %v468
    %v494 = vpack.c.b16 %v471, %v470
    %v495 = vpack.c.b16 %v473, %v472
    %v496 = vpack.c.b16 %v475, %v474
    %v497 = vpack.c.b16 %v477, %v476
    %v498 = vpack.c.b16 %v479, %v478
    %v499 = vpack.c.b16 %v481, %v480
    %v500 = vpack.c.b16 %v483, %v482
    %v501 = vpack.c.b16 %v485, %v484
    %518 = vmatprep.subr.bf16.mxu0 0
    %519 = vmatpush1.bf16.msra.mxu0 %v493
    %520 = vmatprep.subr.bf16.mxu0 0
    %521 = vmatpush1.bf16.msra.mxu0 %v492
    %522 = vmatprep.subr.bf16.mxu0 0
    %523 = vmatpush1.bf16.msra.mxu0 %v491
    %524 = vmatprep.subr.bf16.mxu0 0
    %525 = vmatpush1.bf16.msra.mxu0 %v490
    %526 = vmatprep.subr.bf16.mxu0 0
    %527 = vmatpush1.bf16.msra.mxu0 %v489
    %528 = vmatprep.subr.bf16.mxu0 0
    %529 = vmatpush1.bf16.msra.mxu0 %v488
    %530 = vmatprep.subr.bf16.mxu0 0
    %531 = vmatpush1.bf16.msra.mxu0 %v487
    %532 = vmatprep.subr.bf16.mxu0 0
    %533 = vmatpush1.bf16.msra.mxu0 %v486
    %534 = vmatprep.subr.bf16.mxu0 0
    %535 = vmatpush2.bf16.msra.mxu0 %v501
    %536 = vmatprep.subr.bf16.mxu0 0
    %537 = vmatpush2.bf16.msra.mxu0 %v500
    %538 = vmatprep.subr.bf16.mxu0 0
    %539 = vmatpush2.bf16.msra.mxu0 %v499
    %540 = vmatprep.subr.bf16.mxu0 0
    %541 = vmatpush2.bf16.msra.mxu0 %v498
    %542 = vmatprep.subr.bf16.mxu0 0
    %543 = vmatpush2.bf16.msra.mxu0 %v497
    %544 = vmatprep.subr.bf16.mxu0 0
    %545 = vmatpush2.bf16.msra.mxu0 %v496
    %546 = vmatprep.subr.bf16.mxu0 0
    %547 = vmatpush2.bf16.msra.mxu0 %v495
    %548 = vmatprep.subr.bf16.mxu0 0
    %549 = vmatpush2.bf16.msra.mxu0 %v494
    %550 = vmatprep.mubr.bf16.mxu0 %v188
    %551 = vmatmul.mubr.bf16.gmra.mxu0 %v382
    %v552 = vpop.f32.mrf.mxu0
    %v553 = vadd.f32 %v420, %v552
    %v554 = vpop.f32.mrf.mxu0
    %v555 = vpop.f32.mrf.mxu0
    %v556 = vadd.f32 %v420, %v555
    %v557 = vpop.f32.mrf.mxu0
    %558 = vdwg.mxu0
    %v559 = vmax.f32 %v553, 0.0
    %v560 = vmax.f32 %v556, 0.0
    %v561 = vmul.f32 %v559, %v559
    %v562 = vmul.f32 %v560, %v560
    %563 = vadd.xlane.f32.xlu0 %v561
    %v564 = vpop.xlane.xlu0 %563
    %565 = vadd.xlane.f32.xlu0 %v562
    %v566 = vpop.xlane.xlu0 %565
    %vm567 = vcmp.eq.f32.partialorder %v564, 0.0
    %vm568 = vcmp.eq.f32.partialorder %v566, 0.0
    %v569 = vrsqrt.pop %v564
    %v570 = vrsqrt.pop %v566
    %v571 = vsel %vm567, 1.0, %v569
    %v572 = vsel %vm568, 1.0, %v570
    %v573 = vmul.f32 %v559, %v571
    %v574 = vmul.f32 %v560, %v572
    %v575 = vpack.c.bf16 %v574, %v573
    %v576 = vld [vmem:[%s9] sm:$0xf]
    %v577 = vld [vmem:[%s9 + $0x4] sm:$0xf]
    %v578 = vld [vmem:[%s9 + $0x8] sm:$0xf]
    %v579 = vld [vmem:[%s9 + $0xc] sm:$0xf]
    %v580 = vld [vmem:[%s9 + $0x10] sm:$0xf]
    %v581 = vld [vmem:[%s9 + $0x14] sm:$0xf]
    %v582 = vld [vmem:[%s9 + $0x18] sm:$0xf]
    %v583 = vld [vmem:[%s9 + $0x1c] sm:$0xf]
    %v584 = vld [vmem:[%s9 + $0x20] sm:$0xf]
    %v585 = vld [vmem:[%s9 + $0x24] sm:$0xf]
    %v586 = vld [vmem:[%s9 + $0x28] sm:$0xf]
    %v587 = vld [vmem:[%s9 + $0x2c] sm:$0xf]
    %v588 = vld [vmem:[%s9 + $0x30] sm:$0xf]
    %v589 = vld [vmem:[%s9 + $0x34] sm:$0xf]
    %v590 = vld [vmem:[%s9 + $0x38] sm:$0xf]
    %v591 = vld [vmem:[%s9 + $0x3c] sm:$0xf]
    %v592 = vld [vmem:[%s10] sm:$0x1]
    %v594 = vlaneseq
    %v595 = vshrl.u32 %v594, 7
    %v596 = vsub.s32 0, %v595
    %v597 = vrot.slane %v592, %v596
    %v615 = vunpack.c.l.b16 %v576
    %v616 = vunpack.c.l.b16 %v577
    %v617 = vunpack.c.l.b16 %v578
    %v618 = vunpack.c.l.b16 %v579
    %v619 = vunpack.c.l.b16 %v580
    %v620 = vunpack.c.l.b16 %v581
    %v621 = vunpack.c.l.b16 %v582
    %v622 = vunpack.c.l.b16 %v583
    %v623 = vunpack.c.l.b16 %v584
    %v624 = vunpack.c.l.b16 %v585
    %v625 = vunpack.c.l.b16 %v586
    %v626 = vunpack.c.l.b16 %v587
    %v627 = vunpack.c.l.b16 %v588
    %v628 = vunpack.c.l.b16 %v589
    %v629 = vunpack.c.l.b16 %v590
    %v630 = vunpack.c.l.b16 %v591
    %v631 = vpack.c.b16 %v616, %v615
    %v632 = vpack.c.b16 %v618, %v617
    %v633 = vpack.c.b16 %v620, %v619
    %v634 = vpack.c.b16 %v622, %v621
    %v635 = vpack.c.b16 %v624, %v623
    %v636 = vpack.c.b16 %v626, %v625
    %v637 = vpack.c.b16 %v628, %v627
    %v638 = vpack.c.b16 %v630, %v629
    %647 = vmatprep.subr.bf16.mxu0 0
    %648 = vmatpush1.bf16.msra.mxu0 %v638
    %649 = vmatprep.subr.bf16.mxu0 0
    %650 = vmatpush1.bf16.msra.mxu0 %v637
    %651 = vmatprep.subr.bf16.mxu0 0
    %652 = vmatpush1.bf16.msra.mxu0 %v636
    %653 = vmatprep.subr.bf16.mxu0 0
    %654 = vmatpush1.bf16.msra.mxu0 %v635
    %655 = vmatprep.subr.bf16.mxu0 0
    %656 = vmatpush1.bf16.msra.mxu0 %v634
    %657 = vmatprep.subr.bf16.mxu0 0
    %658 = vmatpush1.bf16.msra.mxu0 %v633
    %659 = vmatprep.subr.bf16.mxu0 0
    %660 = vmatpush1.bf16.msra.mxu0 %v632
    %661 = vmatprep.subr.bf16.mxu0 0
    %662 = vmatpush1.bf16.msra.mxu0 %v631
    %663 = vmatprep.subr.bf16.mxu0 0
    %664 = vmatpush2.bf16.msra.mxu0 0
    %665 = vmatprep.subr.bf16.mxu0 0
    %666 = vmatpush2.bf16.msra.mxu0 0
    %667 = vmatprep.subr.bf16.mxu0 0
    %668 = vmatpush2.bf16.msra.mxu0 0
    %669 = vmatprep.subr.bf16.mxu0 0
    %670 = vmatpush2.bf16.msra.mxu0 0
    %671 = vmatprep.subr.bf16.mxu0 0
    %672 = vmatpush2.bf16.msra.mxu0 0
    %673 = vmatprep.subr.bf16.mxu0 0
    %674 = vmatpush2.bf16.msra.mxu0 0
    %675 = vmatprep.subr.bf16.mxu0 0
    %676 = vmatpush2.bf16.msra.mxu0 0
    %677 = vmatprep.subr.bf16.mxu0 0
    %678 = vmatpush2.bf16.msra.mxu0 0
    %679 = vmatprep.mubr.bf16.mxu0 0
    %680 = vmatmul.mubr.bf16.gmra.mxu0 %v575
    %v681 = vpop.f32.mrf.mxu0
    %v682 = vadd.f32 %v597, %v681
    %v683 = vpop.f32.mrf.mxu0
    %v684 = vpop.f32.mrf.mxu0
    %v685 = vadd.f32 %v597, %v684
    %v686 = vpop.f32.mrf.mxu0
    %687 = vdwg.mxu0
    %v688 = vmax.f32 %v682, 0.0
    %v689 = vmax.f32 %v685, 0.0
    %v690 = vld [vmem:[%s8] sm:$0xf]
    %v691 = vpack.c.bf16 %v689, %v688
    %vm692 = vcmask 130048
    %v694 = vsel %vm692, %v690, 0
    %696 = vmatprep.subr.bf16.mxu0 0
    %697 = vmatpush1.bf16.msra.mxu0 0
    %698 = vmatprep.subr.bf16.mxu0 0
    %699 = vmatpush1.bf16.msra.mxu0 0
    %700 = vmatprep.subr.bf16.mxu0 0
    %701 = vmatpush1.bf16.msra.mxu0 0
    %702 = vmatprep.subr.bf16.mxu0 0
    %703 = vmatpush1.bf16.msra.mxu0 0
    %704 = vmatprep.subr.bf16.mxu0 0
    %705 = vmatpush1.bf16.msra.mxu0 0
    %706 = vmatprep.subr.bf16.mxu0 0
    %707 = vmatpush1.bf16.msra.mxu0 0
    %708 = vmatprep.subr.bf16.mxu0 0
    %709 = vmatpush1.bf16.msra.mxu0 0
    %710 = vmatprep.subr.bf16.mxu0 0
    %711 = vmatpush1.bf16.msra.mxu0 %v691
    %712 = vmatprep.subr.bf16.mxu0 0
    %713 = vmatpush2.bf16.msra.mxu0 0
    %714 = vmatprep.subr.bf16.mxu0 0
    %715 = vmatpush2.bf16.msra.mxu0 0
    %716 = vmatprep.subr.bf16.mxu0 0
    %717 = vmatpush2.bf16.msra.mxu0 0
    %718 = vmatprep.subr.bf16.mxu0 0
    %719 = vmatpush2.bf16.msra.mxu0 0
    %720 = vmatprep.subr.bf16.mxu0 0
    %721 = vmatpush2.bf16.msra.mxu0 0
    %722 = vmatprep.subr.bf16.mxu0 0
    %723 = vmatpush2.bf16.msra.mxu0 0
    %724 = vmatprep.subr.bf16.mxu0 0
    %725 = vmatpush2.bf16.msra.mxu0 0
    %726 = vmatprep.subr.bf16.mxu0 0
    %727 = vmatpush2.bf16.msra.mxu0 0
    %728 = vmatprep.mubr.bf16.mxu0 0
    %729 = vmatmul.mubr.bf16.gmra.mxu0 %v694
    %v730 = vpop.f32.mrf.mxu0
    %v731 = vadd.f32 0.0, %v730
    %v732 = vpop.f32.mrf.mxu0
    %v733 = vpop.f32.mrf.mxu0
    %v734 = vpop.f32.mrf.mxu0
    %735 = vdwg.mxu0
    %v736 = vunpack.c.l.bf16 %v690
    %v737 = vsel %vm692, %v736, 0.0
    %738 = vadd.xlane.f32.xlu0 %v737
    %v739 = vpop.xlane.xlu0 %738
    %v740 = vmax.f32 %v739, 1.0
    %v741 = vrcp.pop %v740
    %v742 = vmul.f32 %v731, %v741
    %v743 = vpack.c.bf16 %v742, %v742
    %v744 = vpack.c.bf16 %v573, %v573
    %v745 = vld [vmem:[%s11] sm:$0xf]
    %v746 = vld [vmem:[%s11 + $0x4] sm:$0xf]
    %v747 = vld [vmem:[%s11 + $0x8] sm:$0xf]
    %v748 = vld [vmem:[%s11 + $0xc] sm:$0xf]
    %v749 = vld [vmem:[%s11 + $0x10] sm:$0xf]
    %v750 = vld [vmem:[%s11 + $0x14] sm:$0xf]
    %v751 = vld [vmem:[%s11 + $0x18] sm:$0xf]
    %v752 = vld [vmem:[%s11 + $0x1c] sm:$0xf]
    %v753 = vld [vmem:[%s11 + $0x20] sm:$0xf]
    %v754 = vld [vmem:[%s11 + $0x24] sm:$0xf]
    %v755 = vld [vmem:[%s11 + $0x28] sm:$0xf]
    %v756 = vld [vmem:[%s11 + $0x2c] sm:$0xf]
    %v757 = vld [vmem:[%s11 + $0x30] sm:$0xf]
    %v758 = vld [vmem:[%s11 + $0x34] sm:$0xf]
    %v759 = vld [vmem:[%s11 + $0x38] sm:$0xf]
    %v760 = vld [vmem:[%s11 + $0x3c] sm:$0xf]
    %v761 = vld [vmem:[%s11 + $0x40] sm:$0xf]
    %v762 = vld [vmem:[%s11 + $0x44] sm:$0xf]
    %v763 = vld [vmem:[%s11 + $0x48] sm:$0xf]
    %v764 = vld [vmem:[%s11 + $0x4c] sm:$0xf]
    %v765 = vld [vmem:[%s11 + $0x50] sm:$0xf]
    %v766 = vld [vmem:[%s11 + $0x54] sm:$0xf]
    %v767 = vld [vmem:[%s11 + $0x58] sm:$0xf]
    %v768 = vld [vmem:[%s11 + $0x5c] sm:$0xf]
    %v769 = vld [vmem:[%s11 + $0x60] sm:$0xf]
    %v770 = vld [vmem:[%s11 + $0x64] sm:$0xf]
    %v771 = vld [vmem:[%s11 + $0x68] sm:$0xf]
    %v772 = vld [vmem:[%s11 + $0x6c] sm:$0xf]
    %v773 = vld [vmem:[%s11 + $0x70] sm:$0xf]
    %v774 = vld [vmem:[%s11 + $0x74] sm:$0xf]
    %v775 = vld [vmem:[%s11 + $0x78] sm:$0xf]
    %v776 = vld [vmem:[%s11 + $0x7c] sm:$0xf]
    %v777 = vld [vmem:[%s12] sm:$0x1]
    %v779 = vlaneseq
    %v780 = vshrl.u32 %v779, 7
    %v781 = vsub.s32 0, %v780
    %v782 = vrot.slane %v777, %v781
    %v816 = vunpack.c.l.b16 %v745
    %v817 = vunpack.c.l.b16 %v746
    %v818 = vunpack.c.l.b16 %v747
    %v819 = vunpack.c.l.b16 %v748
    %v820 = vunpack.c.l.b16 %v749
    %v821 = vunpack.c.l.b16 %v750
    %v822 = vunpack.c.l.b16 %v751
    %v823 = vunpack.c.l.b16 %v752
    %v824 = vunpack.c.l.b16 %v753
    %v825 = vunpack.c.l.b16 %v754
    %v826 = vunpack.c.l.b16 %v755
    %v827 = vunpack.c.l.b16 %v756
    %v828 = vunpack.c.l.b16 %v757
    %v829 = vunpack.c.l.b16 %v758
    %v830 = vunpack.c.l.b16 %v759
    %v831 = vunpack.c.l.b16 %v760
    %v832 = vunpack.c.l.b16 %v761
    %v833 = vunpack.c.l.b16 %v762
    %v834 = vunpack.c.l.b16 %v763
    %v835 = vunpack.c.l.b16 %v764
    %v836 = vunpack.c.l.b16 %v765
    %v837 = vunpack.c.l.b16 %v766
    %v838 = vunpack.c.l.b16 %v767
    %v839 = vunpack.c.l.b16 %v768
    %v840 = vunpack.c.l.b16 %v769
    %v841 = vunpack.c.l.b16 %v770
    %v842 = vunpack.c.l.b16 %v771
    %v843 = vunpack.c.l.b16 %v772
    %v844 = vunpack.c.l.b16 %v773
    %v845 = vunpack.c.l.b16 %v774
    %v846 = vunpack.c.l.b16 %v775
    %v847 = vunpack.c.l.b16 %v776
    %v848 = vpack.c.b16 %v817, %v816
    %v849 = vpack.c.b16 %v819, %v818
    %v850 = vpack.c.b16 %v821, %v820
    %v851 = vpack.c.b16 %v823, %v822
    %v852 = vpack.c.b16 %v825, %v824
    %v853 = vpack.c.b16 %v827, %v826
    %v854 = vpack.c.b16 %v829, %v828
    %v855 = vpack.c.b16 %v831, %v830
    %v856 = vpack.c.b16 %v833, %v832
    %v857 = vpack.c.b16 %v835, %v834
    %v858 = vpack.c.b16 %v837, %v836
    %v859 = vpack.c.b16 %v839, %v838
    %v860 = vpack.c.b16 %v841, %v840
    %v861 = vpack.c.b16 %v843, %v842
    %v862 = vpack.c.b16 %v845, %v844
    %v863 = vpack.c.b16 %v847, %v846
    %880 = vmatprep.subr.bf16.mxu0 0
    %881 = vmatpush1.bf16.msra.mxu0 %v855
    %882 = vmatprep.subr.bf16.mxu0 0
    %883 = vmatpush1.bf16.msra.mxu0 %v854
    %884 = vmatprep.subr.bf16.mxu0 0
    %885 = vmatpush1.bf16.msra.mxu0 %v853
    %886 = vmatprep.subr.bf16.mxu0 0
    %887 = vmatpush1.bf16.msra.mxu0 %v852
    %888 = vmatprep.subr.bf16.mxu0 0
    %889 = vmatpush1.bf16.msra.mxu0 %v851
    %890 = vmatprep.subr.bf16.mxu0 0
    %891 = vmatpush1.bf16.msra.mxu0 %v850
    %892 = vmatprep.subr.bf16.mxu0 0
    %893 = vmatpush1.bf16.msra.mxu0 %v849
    %894 = vmatprep.subr.bf16.mxu0 0
    %895 = vmatpush1.bf16.msra.mxu0 %v848
    %896 = vmatprep.subr.bf16.mxu0 0
    %897 = vmatpush2.bf16.msra.mxu0 %v863
    %898 = vmatprep.subr.bf16.mxu0 0
    %899 = vmatpush2.bf16.msra.mxu0 %v862
    %900 = vmatprep.subr.bf16.mxu0 0
    %901 = vmatpush2.bf16.msra.mxu0 %v861
    %902 = vmatprep.subr.bf16.mxu0 0
    %903 = vmatpush2.bf16.msra.mxu0 %v860
    %904 = vmatprep.subr.bf16.mxu0 0
    %905 = vmatpush2.bf16.msra.mxu0 %v859
    %906 = vmatprep.subr.bf16.mxu0 0
    %907 = vmatpush2.bf16.msra.mxu0 %v858
    %908 = vmatprep.subr.bf16.mxu0 0
    %909 = vmatpush2.bf16.msra.mxu0 %v857
    %910 = vmatprep.subr.bf16.mxu0 0
    %911 = vmatpush2.bf16.msra.mxu0 %v856
    %912 = vmatprep.mubr.bf16.mxu0 %v744
    %913 = vmatmul.mubr.bf16.gmra.mxu0 %v743
    %v914 = vpop.f32.mrf.mxu0
    %v915 = vadd.f32 %v782, %v914
    %v916 = vpop.f32.mrf.mxu0
    %v917 = vpop.f32.mrf.mxu0
    %v918 = vpop.f32.mrf.mxu0
    %919 = vdwg.mxu0
    %v920 = vmax.f32 %v915, 0.0
    %v921 = vmul.f32 %v920, %v920
    %922 = vadd.xlane.f32.xlu0 %v921
    %v923 = vpop.xlane.xlu0 %922
    %vm924 = vcmp.eq.f32.partialorder %v923, 0.0
    %v925 = vrsqrt.pop %v923
    %v926 = vsel %vm924, 1.0, %v925
    %v927 = vmul.f32 %v920, %v926
    %v928 = vadd.f32 %v174, %v927
    %v929 = vld [vmem:[%s13] sm:$0xff]
    %v930 = vld [vmem:[%s13 + $0x8] sm:$0xff]
    %v931 = vld [vmem:[%s13 + $0x10] sm:$0xff]
    %v932 = vld [vmem:[%s13 + $0x18] sm:$0xff]
    %v933 = vld [vmem:[%s13 + $0x20] sm:$0xff]
    %v934 = vld [vmem:[%s13 + $0x28] sm:$0xff]
    %v935 = vld [vmem:[%s13 + $0x30] sm:$0xff]
    %v936 = vld [vmem:[%s13 + $0x38] sm:$0xff]
    %v937 = vld [vmem:[%s13 + $0x40] sm:$0xff]
    %v938 = vld [vmem:[%s13 + $0x48] sm:$0xff]
    %v939 = vld [vmem:[%s13 + $0x50] sm:$0xff]
    %v940 = vld [vmem:[%s13 + $0x58] sm:$0xff]
    %v941 = vld [vmem:[%s13 + $0x60] sm:$0xff]
    %v942 = vld [vmem:[%s13 + $0x68] sm:$0xff]
    %v943 = vld [vmem:[%s13 + $0x70] sm:$0xff]
    %v944 = vld [vmem:[%s13 + $0x78] sm:$0xff]
    %v945 = vld [vmem:[%s13 + $0x80] sm:$0xff]
    %v946 = vld [vmem:[%s13 + $0x88] sm:$0xff]
    %v947 = vld [vmem:[%s13 + $0x90] sm:$0xff]
    %v948 = vld [vmem:[%s13 + $0x98] sm:$0xff]
    %v949 = vld [vmem:[%s13 + $0xa0] sm:$0xff]
    %v950 = vld [vmem:[%s13 + $0xa8] sm:$0xff]
    %v951 = vld [vmem:[%s13 + $0xb0] sm:$0xff]
    %v952 = vld [vmem:[%s13 + $0xb8] sm:$0xff]
    %v953 = vld [vmem:[%s13 + $0xc0] sm:$0xff]
    %v954 = vld [vmem:[%s13 + $0xc8] sm:$0xff]
    %v955 = vld [vmem:[%s13 + $0xd0] sm:$0xff]
    %v956 = vld [vmem:[%s13 + $0xd8] sm:$0xff]
    %v957 = vld [vmem:[%s13 + $0xe0] sm:$0xff]
    %v958 = vld [vmem:[%s13 + $0xe8] sm:$0xff]
    %v959 = vld [vmem:[%s13 + $0xf0] sm:$0xff]
    %v960 = vld [vmem:[%s13 + $0xf8] sm:$0xff]
    %v961 = vld [vmem:[%s13 + $0x100] sm:$0xff]
    %v962 = vld [vmem:[%s13 + $0x108] sm:$0xff]
    %v963 = vld [vmem:[%s13 + $0x110] sm:$0xff]
    %v964 = vld [vmem:[%s13 + $0x118] sm:$0xff]
    %v965 = vld [vmem:[%s13 + $0x120] sm:$0xff]
    %v966 = vld [vmem:[%s13 + $0x128] sm:$0xff]
    %v967 = vld [vmem:[%s13 + $0x130] sm:$0xff]
    %v968 = vld [vmem:[%s13 + $0x138] sm:$0xff]
    %v969 = vld [vmem:[%s13 + $0x140] sm:$0xff]
    %v970 = vld [vmem:[%s13 + $0x148] sm:$0xff]
    %v971 = vld [vmem:[%s13 + $0x150] sm:$0xff]
    %v972 = vld [vmem:[%s13 + $0x158] sm:$0xff]
    %v973 = vld [vmem:[%s13 + $0x160] sm:$0xff]
    %v974 = vld [vmem:[%s13 + $0x168] sm:$0xff]
    %v975 = vld [vmem:[%s13 + $0x170] sm:$0xff]
    %v976 = vld [vmem:[%s13 + $0x178] sm:$0xff]
    %v977 = vld [vmem:[%s13 + $0x180] sm:$0xff]
    %v978 = vld [vmem:[%s13 + $0x188] sm:$0xff]
    %v979 = vld [vmem:[%s13 + $0x190] sm:$0xff]
    %v980 = vld [vmem:[%s13 + $0x198] sm:$0xff]
    %v981 = vld [vmem:[%s13 + $0x1a0] sm:$0xff]
    %v982 = vld [vmem:[%s13 + $0x1a8] sm:$0xff]
    %v983 = vld [vmem:[%s13 + $0x1b0] sm:$0xff]
    %v984 = vld [vmem:[%s13 + $0x1b8] sm:$0xff]
    %v985 = vld [vmem:[%s13 + $0x1c0] sm:$0xff]
    %v986 = vld [vmem:[%s13 + $0x1c8] sm:$0xff]
    %v987 = vld [vmem:[%s13 + $0x1d0] sm:$0xff]
    %v988 = vld [vmem:[%s13 + $0x1d8] sm:$0xff]
    %v989 = vld [vmem:[%s13 + $0x1e0] sm:$0xff]
    %v990 = vld [vmem:[%s13 + $0x1e8] sm:$0xff]
    %v991 = vld [vmem:[%s13 + $0x1f0] sm:$0xff]
    %v992 = vld [vmem:[%s13 + $0x1f8] sm:$0xff]
    %vm993 = vcmask 64512
    %v995 = vsel %vm993, %v929, 0
    %v998 = vsel %vm993, %v930, 0
    %v1001 = vsel %vm993, %v931, 0
    %v1004 = vsel %vm993, %v932, 0
    %v1007 = vsel %vm993, %v933, 0
    %v1010 = vsel %vm993, %v934, 0
    %v1013 = vsel %vm993, %v935, 0
    %v1016 = vsel %vm993, %v936, 0
    %v1019 = vsel %vm993, %v937, 0
    %v1022 = vsel %vm993, %v938, 0
    %v1025 = vsel %vm993, %v939, 0
    %v1028 = vsel %vm993, %v940, 0
    %v1031 = vsel %vm993, %v941, 0
    %v1034 = vsel %vm993, %v942, 0
    %v1037 = vsel %vm993, %v943, 0
    %v1040 = vsel %vm993, %v944, 0
    %v1043 = vsel %vm993, %v945, 0
    %v1046 = vsel %vm993, %v946, 0
    %v1049 = vsel %vm993, %v947, 0
    %v1052 = vsel %vm993, %v948, 0
    %v1055 = vsel %vm993, %v949, 0
    %v1058 = vsel %vm993, %v950, 0
    %v1061 = vsel %vm993, %v951, 0
    %v1064 = vsel %vm993, %v952, 0
    %v1067 = vsel %vm993, %v953, 0
    %v1070 = vsel %vm993, %v954, 0
    %v1073 = vsel %vm993, %v955, 0
    %v1076 = vsel %vm993, %v956, 0
    %v1079 = vsel %vm993, %v957, 0
    %v1082 = vsel %vm993, %v958, 0
    %v1085 = vsel %vm993, %v959, 0
    %v1088 = vsel %vm993, %v960, 0
    %v1091 = vsel %vm993, %v961, 0
    %v1094 = vsel %vm993, %v962, 0
    %v1097 = vsel %vm993, %v963, 0
    %v1100 = vsel %vm993, %v964, 0
    %v1103 = vsel %vm993, %v965, 0
    %v1106 = vsel %vm993, %v966, 0
    %v1109 = vsel %vm993, %v967, 0
    %v1112 = vsel %vm993, %v968, 0
    %v1115 = vsel %vm993, %v969, 0
    %v1118 = vsel %vm993, %v970, 0
    %v1121 = vsel %vm993, %v971, 0
    %v1124 = vsel %vm993, %v972, 0
    %v1127 = vsel %vm993, %v973, 0
    %v1130 = vsel %vm993, %v974, 0
    %v1133 = vsel %vm993, %v975, 0
    %v1136 = vsel %vm993, %v976, 0
    %v1139 = vsel %vm993, %v977, 0
    %v1142 = vsel %vm993, %v978, 0
    %v1145 = vsel %vm993, %v979, 0
    %v1148 = vsel %vm993, %v980, 0
    %v1151 = vsel %vm993, %v981, 0
    %v1154 = vsel %vm993, %v982, 0
    %v1157 = vsel %vm993, %v983, 0
    %v1160 = vsel %vm993, %v984, 0
    %v1163 = vsel %vm993, %v985, 0
    %v1166 = vsel %vm993, %v986, 0
    %v1169 = vsel %vm993, %v987, 0
    %v1172 = vsel %vm993, %v988, 0
    %v1175 = vsel %vm993, %v989, 0
    %v1178 = vsel %vm993, %v990, 0
    %v1181 = vsel %vm993, %v991, 0
    %v1184 = vsel %vm993, %v992, 0
    %1186 = vmatprep.subr.mxu0 0.0
    %1187 = vmatpush1.msra.mxu0 0.0
    %1188 = vmatprep.subr.mxu0 0.0
    %1189 = vmatpush1.msra.mxu0 0.0
    %1190 = vmatprep.subr.mxu0 0.0
    %1191 = vmatpush1.msra.mxu0 0.0
    %1192 = vmatprep.subr.mxu0 0.0
    %1193 = vmatpush1.msra.mxu0 0.0
    %1194 = vmatprep.subr.mxu0 0.0
    %1195 = vmatpush1.msra.mxu0 0.0
    %1196 = vmatprep.subr.mxu0 0.0
    %1197 = vmatpush1.msra.mxu0 0.0
    %1198 = vmatprep.subr.mxu0 0.0
    %1199 = vmatpush1.msra.mxu0 0.0
    %1200 = vmatprep.subr.mxu0 0.0
    %1201 = vmatpush1.msra.mxu0 0.0
    %1202 = vmatprep.subr.mxu0 0.0
    %1203 = vmatpush1.msra.mxu0 0.0
    %1204 = vmatprep.subr.mxu0 0.0
    %1205 = vmatpush1.msra.mxu0 0.0
    %1206 = vmatprep.subr.mxu0 0.0
    %1207 = vmatpush1.msra.mxu0 0.0
    %1208 = vmatprep.subr.mxu0 0.0
    %1209 = vmatpush1.msra.mxu0 0.0
    %1210 = vmatprep.subr.mxu0 0.0
    %1211 = vmatpush1.msra.mxu0 0.0
    %1212 = vmatprep.subr.mxu0 0.0
    %1213 = vmatpush1.msra.mxu0 0.0
    %1214 = vmatprep.subr.mxu0 0.0
    %1215 = vmatpush1.msra.mxu0 0.0
    %1216 = vmatprep.subr.mxu0 0.0
    %1217 = vmatpush1.msra.mxu0 %v928
    %1218 = vmatprep.subr.mxu0 0.0
    %1219 = vmatpush2.msra.mxu0 0.0
    %1220 = vmatprep.subr.mxu0 0.0
    %1221 = vmatpush2.msra.mxu0 0.0
    %1222 = vmatprep.subr.mxu0 0.0
    %1223 = vmatpush2.msra.mxu0 0.0
    %1224 = vmatprep.subr.mxu0 0.0
    %1225 = vmatpush2.msra.mxu0 0.0
    %1226 = vmatprep.subr.mxu0 0.0
    %1227 = vmatpush2.msra.mxu0 0.0
    %1228 = vmatprep.subr.mxu0 0.0
    %1229 = vmatpush2.msra.mxu0 0.0
    %1230 = vmatprep.subr.mxu0 0.0
    %1231 = vmatpush2.msra.mxu0 0.0
    %1232 = vmatprep.subr.mxu0 0.0
    %1233 = vmatpush2.msra.mxu0 0.0
    %1234 = vmatprep.subr.mxu0 0.0
    %1235 = vmatpush2.msra.mxu0 0.0
    %1236 = vmatprep.subr.mxu0 0.0
    %1237 = vmatpush2.msra.mxu0 0.0
    %1238 = vmatprep.subr.mxu0 0.0
    %1239 = vmatpush2.msra.mxu0 0.0
    %1240 = vmatprep.subr.mxu0 0.0
    %1241 = vmatpush2.msra.mxu0 0.0
    %1242 = vmatprep.subr.mxu0 0.0
    %1243 = vmatpush2.msra.mxu0 0.0
    %1244 = vmatprep.subr.mxu0 0.0
    %1245 = vmatpush2.msra.mxu0 0.0
    %1246 = vmatprep.subr.mxu0 0.0
    %1247 = vmatpush2.msra.mxu0 0.0
    %1248 = vmatprep.subr.mxu0 0.0
    %1249 = vmatpush2.msra.mxu0 0.0
    %1250 = vmatprep.mubr.f32.mxu0 0.0
    %1251 = vmatmul.mubr.f32.gmra.mxu0 %v995
    %v1252 = vpop.f32.mrf.mxu0
    %v1253 = vadd.f32 0.0, %v1252
    %v1254 = vpop.f32.mrf.mxu0
    %1255 = vmatprep.mubr.f32.mxu0 0.0
    %1256 = vmatmul.mubr.f32.gmra.mxu0 %v998
    %v1257 = vpop.f32.mrf.mxu0
    %v1258 = vadd.f32 0.0, %v1257
    %v1259 = vpop.f32.mrf.mxu0
    %1260 = vmatprep.mubr.f32.mxu0 0.0
    %1261 = vmatmul.mubr.f32.gmra.mxu0 %v1001
    %v1262 = vpop.f32.mrf.mxu0
    %v1263 = vadd.f32 0.0, %v1262
    %v1264 = vpop.f32.mrf.mxu0
    %1265 = vmatprep.mubr.f32.mxu0 0.0
    %1266 = vmatmul.mubr.f32.gmra.mxu0 %v1004
    %v1267 = vpop.f32.mrf.mxu0
    %v1268 = vadd.f32 0.0, %v1267
    %v1269 = vpop.f32.mrf.mxu0
    %1270 = vmatprep.mubr.f32.mxu0 0.0
    %1271 = vmatmul.mubr.f32.gmra.mxu0 %v1007
    %v1272 = vpop.f32.mrf.mxu0
    %v1273 = vadd.f32 0.0, %v1272
    %v1274 = vpop.f32.mrf.mxu0
    %1275 = vmatprep.mubr.f32.mxu0 0.0
    %1276 = vmatmul.mubr.f32.gmra.mxu0 %v1010
    %v1277 = vpop.f32.mrf.mxu0
    %v1278 = vadd.f32 0.0, %v1277
    %v1279 = vpop.f32.mrf.mxu0
    %1280 = vmatprep.mubr.f32.mxu0 0.0
    %1281 = vmatmul.mubr.f32.gmra.mxu0 %v1013
    %v1282 = vpop.f32.mrf.mxu0
    %v1283 = vadd.f32 0.0, %v1282
    %v1284 = vpop.f32.mrf.mxu0
    %1285 = vmatprep.mubr.f32.mxu0 0.0
    %1286 = vmatmul.mubr.f32.gmra.mxu0 %v1016
    %v1287 = vpop.f32.mrf.mxu0
    %v1288 = vadd.f32 0.0, %v1287
    %v1289 = vpop.f32.mrf.mxu0
    %1290 = vmatprep.mubr.f32.mxu0 0.0
    %1291 = vmatmul.mubr.f32.gmra.mxu0 %v1019
    %v1292 = vpop.f32.mrf.mxu0
    %v1293 = vadd.f32 0.0, %v1292
    %v1294 = vpop.f32.mrf.mxu0
    %1295 = vmatprep.mubr.f32.mxu0 0.0
    %1296 = vmatmul.mubr.f32.gmra.mxu0 %v1022
    %v1297 = vpop.f32.mrf.mxu0
    %v1298 = vadd.f32 0.0, %v1297
    %v1299 = vpop.f32.mrf.mxu0
    %1300 = vmatprep.mubr.f32.mxu0 0.0
    %1301 = vmatmul.mubr.f32.gmra.mxu0 %v1025
    %v1302 = vpop.f32.mrf.mxu0
    %v1303 = vadd.f32 0.0, %v1302
    %v1304 = vpop.f32.mrf.mxu0
    %1305 = vmatprep.mubr.f32.mxu0 0.0
    %1306 = vmatmul.mubr.f32.gmra.mxu0 %v1028
    %v1307 = vpop.f32.mrf.mxu0
    %v1308 = vadd.f32 0.0, %v1307
    %v1309 = vpop.f32.mrf.mxu0
    %1310 = vmatprep.mubr.f32.mxu0 0.0
    %1311 = vmatmul.mubr.f32.gmra.mxu0 %v1031
    %v1312 = vpop.f32.mrf.mxu0
    %v1313 = vadd.f32 0.0, %v1312
    %v1314 = vpop.f32.mrf.mxu0
    %1315 = vmatprep.mubr.f32.mxu0 0.0
    %1316 = vmatmul.mubr.f32.gmra.mxu0 %v1034
    %v1317 = vpop.f32.mrf.mxu0
    %v1318 = vadd.f32 0.0, %v1317
    %v1319 = vpop.f32.mrf.mxu0
    %1320 = vmatprep.mubr.f32.mxu0 0.0
    %1321 = vmatmul.mubr.f32.gmra.mxu0 %v1037
    %v1322 = vpop.f32.mrf.mxu0
    %v1323 = vadd.f32 0.0, %v1322
    %v1324 = vpop.f32.mrf.mxu0
    %1325 = vmatprep.mubr.f32.mxu0 0.0
    %1326 = vmatmul.mubr.f32.gmra.mxu0 %v1040
    %v1327 = vpop.f32.mrf.mxu0
    %v1328 = vadd.f32 0.0, %v1327
    %v1329 = vpop.f32.mrf.mxu0
    %1330 = vmatprep.mubr.f32.mxu0 0.0
    %1331 = vmatmul.mubr.f32.gmra.mxu0 %v1043
    %v1332 = vpop.f32.mrf.mxu0
    %v1333 = vadd.f32 0.0, %v1332
    %v1334 = vpop.f32.mrf.mxu0
    %1335 = vmatprep.mubr.f32.mxu0 0.0
    %1336 = vmatmul.mubr.f32.gmra.mxu0 %v1046
    %v1337 = vpop.f32.mrf.mxu0
    %v1338 = vadd.f32 0.0, %v1337
    %v1339 = vpop.f32.mrf.mxu0
    %1340 = vmatprep.mubr.f32.mxu0 0.0
    %1341 = vmatmul.mubr.f32.gmra.mxu0 %v1049
    %v1342 = vpop.f32.mrf.mxu0
    %v1343 = vadd.f32 0.0, %v1342
    %v1344 = vpop.f32.mrf.mxu0
    %1345 = vmatprep.mubr.f32.mxu0 0.0
    %1346 = vmatmul.mubr.f32.gmra.mxu0 %v1052
    %v1347 = vpop.f32.mrf.mxu0
    %v1348 = vadd.f32 0.0, %v1347
    %v1349 = vpop.f32.mrf.mxu0
    %1350 = vmatprep.mubr.f32.mxu0 0.0
    %1351 = vmatmul.mubr.f32.gmra.mxu0 %v1055
    %v1352 = vpop.f32.mrf.mxu0
    %v1353 = vadd.f32 0.0, %v1352
    %v1354 = vpop.f32.mrf.mxu0
    %1355 = vmatprep.mubr.f32.mxu0 0.0
    %1356 = vmatmul.mubr.f32.gmra.mxu0 %v1058
    %v1357 = vpop.f32.mrf.mxu0
    %v1358 = vadd.f32 0.0, %v1357
    %v1359 = vpop.f32.mrf.mxu0
    %1360 = vmatprep.mubr.f32.mxu0 0.0
    %1361 = vmatmul.mubr.f32.gmra.mxu0 %v1061
    %v1362 = vpop.f32.mrf.mxu0
    %v1363 = vadd.f32 0.0, %v1362
    %v1364 = vpop.f32.mrf.mxu0
    %1365 = vmatprep.mubr.f32.mxu0 0.0
    %1366 = vmatmul.mubr.f32.gmra.mxu0 %v1064
    %v1367 = vpop.f32.mrf.mxu0
    %v1368 = vadd.f32 0.0, %v1367
    %v1369 = vpop.f32.mrf.mxu0
    %1370 = vmatprep.mubr.f32.mxu0 0.0
    %1371 = vmatmul.mubr.f32.gmra.mxu0 %v1067
    %v1372 = vpop.f32.mrf.mxu0
    %v1373 = vadd.f32 0.0, %v1372
    %v1374 = vpop.f32.mrf.mxu0
    %1375 = vmatprep.mubr.f32.mxu0 0.0
    %1376 = vmatmul.mubr.f32.gmra.mxu0 %v1070
    %v1377 = vpop.f32.mrf.mxu0
    %v1378 = vadd.f32 0.0, %v1377
    %v1379 = vpop.f32.mrf.mxu0
    %1380 = vmatprep.mubr.f32.mxu0 0.0
    %1381 = vmatmul.mubr.f32.gmra.mxu0 %v1073
    %v1382 = vpop.f32.mrf.mxu0
    %v1383 = vadd.f32 0.0, %v1382
    %v1384 = vpop.f32.mrf.mxu0
    %1385 = vmatprep.mubr.f32.mxu0 0.0
    %1386 = vmatmul.mubr.f32.gmra.mxu0 %v1076
    %v1387 = vpop.f32.mrf.mxu0
    %v1388 = vadd.f32 0.0, %v1387
    %v1389 = vpop.f32.mrf.mxu0
    %1390 = vmatprep.mubr.f32.mxu0 0.0
    %1391 = vmatmul.mubr.f32.gmra.mxu0 %v1079
    %v1392 = vpop.f32.mrf.mxu0
    %v1393 = vadd.f32 0.0, %v1392
    %v1394 = vpop.f32.mrf.mxu0
    %1395 = vmatprep.mubr.f32.mxu0 0.0
    %1396 = vmatmul.mubr.f32.gmra.mxu0 %v1082
    %v1397 = vpop.f32.mrf.mxu0
    %v1398 = vadd.f32 0.0, %v1397
    %v1399 = vpop.f32.mrf.mxu0
    %1400 = vmatprep.mubr.f32.mxu0 0.0
    %1401 = vmatmul.mubr.f32.gmra.mxu0 %v1085
    %v1402 = vpop.f32.mrf.mxu0
    %v1403 = vadd.f32 0.0, %v1402
    %v1404 = vpop.f32.mrf.mxu0
    %1405 = vmatprep.mubr.f32.mxu0 0.0
    %1406 = vmatmul.mubr.f32.gmra.mxu0 %v1088
    %v1407 = vpop.f32.mrf.mxu0
    %v1408 = vadd.f32 0.0, %v1407
    %v1409 = vpop.f32.mrf.mxu0
    %1410 = vmatprep.mubr.f32.mxu0 0.0
    %1411 = vmatmul.mubr.f32.gmra.mxu0 %v1091
    %v1412 = vpop.f32.mrf.mxu0
    %v1413 = vadd.f32 0.0, %v1412
    %v1414 = vpop.f32.mrf.mxu0
    %1415 = vmatprep.mubr.f32.mxu0 0.0
    %1416 = vmatmul.mubr.f32.gmra.mxu0 %v1094
    %v1417 = vpop.f32.mrf.mxu0
    %v1418 = vadd.f32 0.0, %v1417
    %v1419 = vpop.f32.mrf.mxu0
    %1420 = vmatprep.mubr.f32.mxu0 0.0
    %1421 = vmatmul.mubr.f32.gmra.mxu0 %v1097
    %v1422 = vpop.f32.mrf.mxu0
    %v1423 = vadd.f32 0.0, %v1422
    %v1424 = vpop.f32.mrf.mxu0
    %1425 = vmatprep.mubr.f32.mxu0 0.0
    %1426 = vmatmul.mubr.f32.gmra.mxu0 %v1100
    %v1427 = vpop.f32.mrf.mxu0
    %v1428 = vadd.f32 0.0, %v1427
    %v1429 = vpop.f32.mrf.mxu0
    %1430 = vmatprep.mubr.f32.mxu0 0.0
    %1431 = vmatmul.mubr.f32.gmra.mxu0 %v1103
    %v1432 = vpop.f32.mrf.mxu0
    %v1433 = vadd.f32 0.0, %v1432
    %v1434 = vpop.f32.mrf.mxu0
    %1435 = vmatprep.mubr.f32.mxu0 0.0
    %1436 = vmatmul.mubr.f32.gmra.mxu0 %v1106
    %v1437 = vpop.f32.mrf.mxu0
    %v1438 = vadd.f32 0.0, %v1437
    %v1439 = vpop.f32.mrf.mxu0
    %1440 = vmatprep.mubr.f32.mxu0 0.0
    %1441 = vmatmul.mubr.f32.gmra.mxu0 %v1109
    %v1442 = vpop.f32.mrf.mxu0
    %v1443 = vadd.f32 0.0, %v1442
    %v1444 = vpop.f32.mrf.mxu0
    %1445 = vmatprep.mubr.f32.mxu0 0.0
    %1446 = vmatmul.mubr.f32.gmra.mxu0 %v1112
    %v1447 = vpop.f32.mrf.mxu0
    %v1448 = vadd.f32 0.0, %v1447
    %v1449 = vpop.f32.mrf.mxu0
    %1450 = vmatprep.mubr.f32.mxu0 0.0
    %1451 = vmatmul.mubr.f32.gmra.mxu0 %v1115
    %v1452 = vpop.f32.mrf.mxu0
    %v1453 = vadd.f32 0.0, %v1452
    %v1454 = vpop.f32.mrf.mxu0
    %1455 = vmatprep.mubr.f32.mxu0 0.0
    %1456 = vmatmul.mubr.f32.gmra.mxu0 %v1118
    %v1457 = vpop.f32.mrf.mxu0
    %v1458 = vadd.f32 0.0, %v1457
    %v1459 = vpop.f32.mrf.mxu0
    %1460 = vmatprep.mubr.f32.mxu0 0.0
    %1461 = vmatmul.mubr.f32.gmra.mxu0 %v1121
    %v1462 = vpop.f32.mrf.mxu0
    %v1463 = vadd.f32 0.0, %v1462
    %v1464 = vpop.f32.mrf.mxu0
    %1465 = vmatprep.mubr.f32.mxu0 0.0
    %1466 = vmatmul.mubr.f32.gmra.mxu0 %v1124
    %v1467 = vpop.f32.mrf.mxu0
    %v1468 = vadd.f32 0.0, %v1467
    %v1469 = vpop.f32.mrf.mxu0
    %1470 = vmatprep.mubr.f32.mxu0 0.0
    %1471 = vmatmul.mubr.f32.gmra.mxu0 %v1127
    %v1472 = vpop.f32.mrf.mxu0
    %v1473 = vadd.f32 0.0, %v1472
    %v1474 = vpop.f32.mrf.mxu0
    %1475 = vmatprep.mubr.f32.mxu0 0.0
    %1476 = vmatmul.mubr.f32.gmra.mxu0 %v1130
    %v1477 = vpop.f32.mrf.mxu0
    %v1478 = vadd.f32 0.0, %v1477
    %v1479 = vpop.f32.mrf.mxu0
    %1480 = vmatprep.mubr.f32.mxu0 0.0
    %1481 = vmatmul.mubr.f32.gmra.mxu0 %v1133
    %v1482 = vpop.f32.mrf.mxu0
    %v1483 = vadd.f32 0.0, %v1482
    %v1484 = vpop.f32.mrf.mxu0
    %1485 = vmatprep.mubr.f32.mxu0 0.0
    %1486 = vmatmul.mubr.f32.gmra.mxu0 %v1136
    %v1487 = vpop.f32.mrf.mxu0
    %v1488 = vadd.f32 0.0, %v1487
    %v1489 = vpop.f32.mrf.mxu0
    %1490 = vmatprep.mubr.f32.mxu0 0.0
    %1491 = vmatmul.mubr.f32.gmra.mxu0 %v1139
    %v1492 = vpop.f32.mrf.mxu0
    %v1493 = vadd.f32 0.0, %v1492
    %v1494 = vpop.f32.mrf.mxu0
    %1495 = vmatprep.mubr.f32.mxu0 0.0
    %1496 = vmatmul.mubr.f32.gmra.mxu0 %v1142
    %v1497 = vpop.f32.mrf.mxu0
    %v1498 = vadd.f32 0.0, %v1497
    %v1499 = vpop.f32.mrf.mxu0
    %1500 = vmatprep.mubr.f32.mxu0 0.0
    %1501 = vmatmul.mubr.f32.gmra.mxu0 %v1145
    %v1502 = vpop.f32.mrf.mxu0
    %v1503 = vadd.f32 0.0, %v1502
    %v1504 = vpop.f32.mrf.mxu0
    %1505 = vmatprep.mubr.f32.mxu0 0.0
    %1506 = vmatmul.mubr.f32.gmra.mxu0 %v1148
    %v1507 = vpop.f32.mrf.mxu0
    %v1508 = vadd.f32 0.0, %v1507
    %v1509 = vpop.f32.mrf.mxu0
    %1510 = vmatprep.mubr.f32.mxu0 0.0
    %1511 = vmatmul.mubr.f32.gmra.mxu0 %v1151
    %v1512 = vpop.f32.mrf.mxu0
    %v1513 = vadd.f32 0.0, %v1512
    %v1514 = vpop.f32.mrf.mxu0
    %1515 = vmatprep.mubr.f32.mxu0 0.0
    %1516 = vmatmul.mubr.f32.gmra.mxu0 %v1154
    %v1517 = vpop.f32.mrf.mxu0
    %v1518 = vadd.f32 0.0, %v1517
    %v1519 = vpop.f32.mrf.mxu0
    %1520 = vmatprep.mubr.f32.mxu0 0.0
    %1521 = vmatmul.mubr.f32.gmra.mxu0 %v1157
    %v1522 = vpop.f32.mrf.mxu0
    %v1523 = vadd.f32 0.0, %v1522
    %v1524 = vpop.f32.mrf.mxu0
    %1525 = vmatprep.mubr.f32.mxu0 0.0
    %1526 = vmatmul.mubr.f32.gmra.mxu0 %v1160
    %v1527 = vpop.f32.mrf.mxu0
    %v1528 = vadd.f32 0.0, %v1527
    %v1529 = vpop.f32.mrf.mxu0
    %1530 = vmatprep.mubr.f32.mxu0 0.0
    %1531 = vmatmul.mubr.f32.gmra.mxu0 %v1163
    %v1532 = vpop.f32.mrf.mxu0
    %v1533 = vadd.f32 0.0, %v1532
    %v1534 = vpop.f32.mrf.mxu0
    %1535 = vmatprep.mubr.f32.mxu0 0.0
    %1536 = vmatmul.mubr.f32.gmra.mxu0 %v1166
    %v1537 = vpop.f32.mrf.mxu0
    %v1538 = vadd.f32 0.0, %v1537
    %v1539 = vpop.f32.mrf.mxu0
    %1540 = vmatprep.mubr.f32.mxu0 0.0
    %1541 = vmatmul.mubr.f32.gmra.mxu0 %v1169
    %v1542 = vpop.f32.mrf.mxu0
    %v1543 = vadd.f32 0.0, %v1542
    %v1544 = vpop.f32.mrf.mxu0
    %1545 = vmatprep.mubr.f32.mxu0 0.0
    %1546 = vmatmul.mubr.f32.gmra.mxu0 %v1172
    %v1547 = vpop.f32.mrf.mxu0
    %v1548 = vadd.f32 0.0, %v1547
    %v1549 = vpop.f32.mrf.mxu0
    %1550 = vmatprep.mubr.f32.mxu0 0.0
    %1551 = vmatmul.mubr.f32.gmra.mxu0 %v1175
    %v1552 = vpop.f32.mrf.mxu0
    %v1553 = vadd.f32 0.0, %v1552
    %v1554 = vpop.f32.mrf.mxu0
    %1555 = vmatprep.mubr.f32.mxu0 0.0
    %1556 = vmatmul.mubr.f32.gmra.mxu0 %v1178
    %v1557 = vpop.f32.mrf.mxu0
    %v1558 = vadd.f32 0.0, %v1557
    %v1559 = vpop.f32.mrf.mxu0
    %1560 = vmatprep.mubr.f32.mxu0 0.0
    %1561 = vmatmul.mubr.f32.gmra.mxu0 %v1181
    %v1562 = vpop.f32.mrf.mxu0
    %v1563 = vadd.f32 0.0, %v1562
    %v1564 = vpop.f32.mrf.mxu0
    %1565 = vmatprep.mubr.f32.mxu0 0.0
    %1566 = vmatmul.mubr.f32.gmra.mxu0 %v1184
    %v1567 = vpop.f32.mrf.mxu0
    %v1568 = vadd.f32 0.0, %v1567
    %v1569 = vpop.f32.mrf.mxu0
    %1570 = vdwg.mxu0
    %v1571 = vmul.f32 %v1413, %v1493
    %v1572 = vmul.f32 %v1418, %v1498
    %v1573 = vmul.f32 %v1423, %v1503
    %v1574 = vmul.f32 %v1428, %v1508
    %v1575 = vmul.f32 %v1433, %v1513
    %v1576 = vmul.f32 %v1438, %v1518
    %v1577 = vmul.f32 %v1443, %v1523
    %v1578 = vmul.f32 %v1448, %v1528
    %v1579 = vmul.f32 %v1453, %v1533
    %v1580 = vmul.f32 %v1458, %v1538
    %v1581 = vmul.f32 %v1463, %v1543
    %v1582 = vmul.f32 %v1468, %v1548
    %v1583 = vmul.f32 %v1473, %v1553
    %v1584 = vmul.f32 %v1478, %v1558
    %v1585 = vmul.f32 %v1483, %v1563
    %v1586 = vmul.f32 %v1488, %v1568
    %v1587 = vmul.f32 %v1253, %v1333
    %v1588 = vmul.f32 %v1258, %v1338
    %v1589 = vmul.f32 %v1263, %v1343
    %v1590 = vmul.f32 %v1268, %v1348
    %v1591 = vmul.f32 %v1273, %v1353
    %v1592 = vmul.f32 %v1278, %v1358
    %v1593 = vmul.f32 %v1283, %v1363
    %v1594 = vmul.f32 %v1288, %v1368
    %v1595 = vmul.f32 %v1293, %v1373
    %v1596 = vmul.f32 %v1298, %v1378
    %v1597 = vmul.f32 %v1303, %v1383
    %v1598 = vmul.f32 %v1308, %v1388
    %v1599 = vmul.f32 %v1313, %v1393
    %v1600 = vmul.f32 %v1318, %v1398
    %v1601 = vmul.f32 %v1323, %v1403
    %v1602 = vmul.f32 %v1328, %v1408
    %v1603 = vsub.f32 %v1571, %v1587
    %v1604 = vsub.f32 %v1572, %v1588
    %v1605 = vsub.f32 %v1573, %v1589
    %v1606 = vsub.f32 %v1574, %v1590
    %v1607 = vsub.f32 %v1575, %v1591
    %v1608 = vsub.f32 %v1576, %v1592
    %v1609 = vsub.f32 %v1577, %v1593
    %v1610 = vsub.f32 %v1578, %v1594
    %v1611 = vsub.f32 %v1579, %v1595
    %v1612 = vsub.f32 %v1580, %v1596
    %v1613 = vsub.f32 %v1581, %v1597
    %v1614 = vsub.f32 %v1582, %v1598
    %v1615 = vsub.f32 %v1583, %v1599
    %v1616 = vsub.f32 %v1584, %v1600
    %v1617 = vsub.f32 %v1585, %v1601
    %v1618 = vsub.f32 %v1586, %v1602
    %1619 = vadd.xlane.f32.xlu0 %v1603
    %v1620 = vpop.xlane.xlu0 %1619
    %1621 = vadd.xlane.f32.xlu0 %v1604
    %v1622 = vpop.xlane.xlu0 %1621
    %1623 = vadd.xlane.f32.xlu0 %v1605
    %v1624 = vpop.xlane.xlu0 %1623
    %1625 = vadd.xlane.f32.xlu0 %v1606
    %v1626 = vpop.xlane.xlu0 %1625
    %1627 = vadd.xlane.f32.xlu0 %v1607
    %v1628 = vpop.xlane.xlu0 %1627
    %1629 = vadd.xlane.f32.xlu0 %v1608
    %v1630 = vpop.xlane.xlu0 %1629
    %1631 = vadd.xlane.f32.xlu0 %v1609
    %v1632 = vpop.xlane.xlu0 %1631
    %1633 = vadd.xlane.f32.xlu0 %v1610
    %v1634 = vpop.xlane.xlu0 %1633
    %1635 = vadd.xlane.f32.xlu0 %v1611
    %v1636 = vpop.xlane.xlu0 %1635
    %1637 = vadd.xlane.f32.xlu0 %v1612
    %v1638 = vpop.xlane.xlu0 %1637
    %1639 = vadd.xlane.f32.xlu0 %v1613
    %v1640 = vpop.xlane.xlu0 %1639
    %1641 = vadd.xlane.f32.xlu0 %v1614
    %v1642 = vpop.xlane.xlu0 %1641
    %1643 = vadd.xlane.f32.xlu0 %v1615
    %v1644 = vpop.xlane.xlu0 %1643
    %1645 = vadd.xlane.f32.xlu0 %v1616
    %v1646 = vpop.xlane.xlu0 %1645
    %1647 = vadd.xlane.f32.xlu0 %v1617
    %v1648 = vpop.xlane.xlu0 %1647
    %1649 = vadd.xlane.f32.xlu0 %v1618
    %v1650 = vpop.xlane.xlu0 %1649
    %v1651 = vld [vmem:[%s14] sm:$0x1]
    %v1653 = vlaneseq
    %v1654 = vshrl.u32 %v1653, 7
    %v1655 = vsub.s32 0, %v1654
    %v1656 = vrot.slane %v1651, %v1655
    %1658 = vbcast.lane.b32.xlu0 %v1656, 256
    %v1659 = vpop.permute.xlu0 %1658
    %s1661 = sor.u32 256, 8
    %1662 = vbcast.lane.b32.xlu0 %v1656, %s1661
    %v1663 = vpop.permute.xlu0 %1662
    %s1665 = sor.u32 256, 16
    %1666 = vbcast.lane.b32.xlu0 %v1656, %s1665
    %v1667 = vpop.permute.xlu0 %1666
    %s1669 = sor.u32 256, 24
    %1670 = vbcast.lane.b32.xlu0 %v1656, %s1669
    %v1671 = vpop.permute.xlu0 %1670
    %s1673 = sor.u32 256, 32
    %1674 = vbcast.lane.b32.xlu0 %v1656, %s1673
    %v1675 = vpop.permute.xlu0 %1674
    %s1677 = sor.u32 256, 40
    %1678 = vbcast.lane.b32.xlu0 %v1656, %s1677
    %v1679 = vpop.permute.xlu0 %1678
    %s1681 = sor.u32 256, 48
    %1682 = vbcast.lane.b32.xlu0 %v1656, %s1681
    %v1683 = vpop.permute.xlu0 %1682
    %s1685 = sor.u32 256, 56
    %1686 = vbcast.lane.b32.xlu0 %v1656, %s1685
    %v1687 = vpop.permute.xlu0 %1686
    %s1689 = sor.u32 256, 64
    %1690 = vbcast.lane.b32.xlu0 %v1656, %s1689
    %v1691 = vpop.permute.xlu0 %1690
    %s1693 = sor.u32 256, 72
    %1694 = vbcast.lane.b32.xlu0 %v1656, %s1693
    %v1695 = vpop.permute.xlu0 %1694
    %s1697 = sor.u32 256, 80
    %1698 = vbcast.lane.b32.xlu0 %v1656, %s1697
    %v1699 = vpop.permute.xlu0 %1698
    %s1701 = sor.u32 256, 88
    %1702 = vbcast.lane.b32.xlu0 %v1656, %s1701
    %v1703 = vpop.permute.xlu0 %1702
    %s1705 = sor.u32 256, 96
    %1706 = vbcast.lane.b32.xlu0 %v1656, %s1705
    %v1707 = vpop.permute.xlu0 %1706
    %s1709 = sor.u32 256, 104
    %1710 = vbcast.lane.b32.xlu0 %v1656, %s1709
    %v1711 = vpop.permute.xlu0 %1710
    %s1713 = sor.u32 256, 112
    %1714 = vbcast.lane.b32.xlu0 %v1656, %s1713
    %v1715 = vpop.permute.xlu0 %1714
    %s1717 = sor.u32 256, 120
    %1718 = vbcast.lane.b32.xlu0 %v1656, %s1717
    %v1719 = vpop.permute.xlu0 %1718
    %v1736 = vadd.f32 %v1620, %v1659
    %v1737 = vadd.f32 %v1622, %v1663
    %v1738 = vadd.f32 %v1624, %v1667
    %v1739 = vadd.f32 %v1626, %v1671
    %v1740 = vadd.f32 %v1628, %v1675
    %v1741 = vadd.f32 %v1630, %v1679
    %v1742 = vadd.f32 %v1632, %v1683
    %v1743 = vadd.f32 %v1634, %v1687
    %v1744 = vadd.f32 %v1636, %v1691
    %v1745 = vadd.f32 %v1638, %v1695
    %v1746 = vadd.f32 %v1640, %v1699
    %v1747 = vadd.f32 %v1642, %v1703
    %v1748 = vadd.f32 %v1644, %v1707
    %v1749 = vadd.f32 %v1646, %v1711
    %v1750 = vadd.f32 %v1648, %v1715
    %v1751 = vadd.f32 %v1650, %v1719
    %v1752 = vadd.f32 %v1736, 1.0
    %v1753 = vadd.f32 %v1737, 1.0
    %v1754 = vadd.f32 %v1738, 1.0
    %v1755 = vadd.f32 %v1739, 1.0
    %v1756 = vadd.f32 %v1740, 1.0
    %v1757 = vadd.f32 %v1741, 1.0
    %v1758 = vadd.f32 %v1742, 1.0
    %v1759 = vadd.f32 %v1743, 1.0
    %v1760 = vadd.f32 %v1744, 1.0
    %v1761 = vadd.f32 %v1745, 1.0
    %v1762 = vadd.f32 %v1746, 1.0
    %v1763 = vadd.f32 %v1747, 1.0
    %v1764 = vadd.f32 %v1748, 1.0
    %v1765 = vadd.f32 %v1749, 1.0
    %v1766 = vadd.f32 %v1750, 1.0
    %v1767 = vadd.f32 %v1751, 1.0
    %v1768 = vmax.f32 %v1752, 0.0
    %v1769 = vmax.f32 %v1753, 0.0
    %v1770 = vmax.f32 %v1754, 0.0
    %v1771 = vmax.f32 %v1755, 0.0
    %v1772 = vmax.f32 %v1756, 0.0
    %v1773 = vmax.f32 %v1757, 0.0
    %v1774 = vmax.f32 %v1758, 0.0
    %v1775 = vmax.f32 %v1759, 0.0
    %v1776 = vmax.f32 %v1760, 0.0
    %v1777 = vmax.f32 %v1761, 0.0
    %v1778 = vmax.f32 %v1762, 0.0
    %v1779 = vmax.f32 %v1763, 0.0
    %v1780 = vmax.f32 %v1764, 0.0
    %v1781 = vmax.f32 %v1765, 0.0
    %v1782 = vmax.f32 %v1766, 0.0
    %v1783 = vmax.f32 %v1767, 0.0
    %1800 = vset.pattern.permute.xlu0 0
    %1801 = vperm.xlu0 %1800, %v1768
    %v1802 = vpop.permute.xlu0 %1801
    %1803 = vset.pattern.permute.xlu0 0
    %1804 = vperm.xlu0 %1803, %v1769
    %v1805 = vpop.permute.xlu0 %1804
    %1806 = vset.pattern.permute.xlu0 0
    %1807 = vperm.xlu0 %1806, %v1770
    %v1808 = vpop.permute.xlu0 %1807
    %1809 = vset.pattern.permute.xlu0 0
    %1810 = vperm.xlu0 %1809, %v1771
    %v1811 = vpop.permute.xlu0 %1810
    %1812 = vset.pattern.permute.xlu0 0
    %1813 = vperm.xlu0 %1812, %v1772
    %v1814 = vpop.permute.xlu0 %1813
    %1815 = vset.pattern.permute.xlu0 0
    %1816 = vperm.xlu0 %1815, %v1773
    %v1817 = vpop.permute.xlu0 %1816
    %1818 = vset.pattern.permute.xlu0 0
    %1819 = vperm.xlu0 %1818, %v1774
    %v1820 = vpop.permute.xlu0 %1819
    %1821 = vset.pattern.permute.xlu0 0
    %1822 = vperm.xlu0 %1821, %v1775
    %v1823 = vpop.permute.xlu0 %1822
    %1824 = vset.pattern.permute.xlu0 0
    %1825 = vperm.xlu0 %1824, %v1776
    %v1826 = vpop.permute.xlu0 %1825
    %1827 = vset.pattern.permute.xlu0 0
    %1828 = vperm.xlu0 %1827, %v1777
    %v1829 = vpop.permute.xlu0 %1828
    %1830 = vset.pattern.permute.xlu0 0
    %1831 = vperm.xlu0 %1830, %v1778
    %v1832 = vpop.permute.xlu0 %1831
    %1833 = vset.pattern.permute.xlu0 0
    %1834 = vperm.xlu0 %1833, %v1779
    %v1835 = vpop.permute.xlu0 %1834
    %1836 = vset.pattern.permute.xlu0 0
    %1837 = vperm.xlu0 %1836, %v1780
    %v1838 = vpop.permute.xlu0 %1837
    %1839 = vset.pattern.permute.xlu0 0
    %1840 = vperm.xlu0 %1839, %v1781
    %v1841 = vpop.permute.xlu0 %1840
    %1842 = vset.pattern.permute.xlu0 0
    %1843 = vperm.xlu0 %1842, %v1782
    %v1844 = vpop.permute.xlu0 %1843
    %1845 = vset.pattern.permute.xlu0 0
    %1846 = vperm.xlu0 %1845, %v1783
    %v1847 = vpop.permute.xlu0 %1846
    %v1848 = vlaneseq
    %v1849 = vand.u32 %v1848, 127
    %v1850 = vlaneseq
    %v1851 = vshrl.u32 %v1850, 7
    %v1852 = vsub.s32 %v1849, %v1851
    %v1853 = vrot.slane %v1802, %v1852
    %v1854 = vadd.s32 %v1849, 4294967288
    %v1855 = vlaneseq
    %v1856 = vshrl.u32 %v1855, 7
    %v1857 = vsub.s32 %v1854, %v1856
    %v1858 = vrot.slane %v1805, %v1857
    %vm1859 = vcmask 130112
    %v1860 = vsel %vm1859, %v1858, %v1853
    %v1861 = vadd.s32 %v1849, 4294967280
    %v1862 = vlaneseq
    %v1863 = vshrl.u32 %v1862, 7
    %v1864 = vsub.s32 %v1861, %v1863
    %v1865 = vrot.slane %v1808, %v1864
    %vm1866 = vcmask 195712
    %v1867 = vsel %vm1866, %v1865, %v1860
    %v1868 = vadd.s32 %v1849, 4294967272
    %v1869 = vlaneseq
    %v1870 = vshrl.u32 %v1869, 7
    %v1871 = vsub.s32 %v1868, %v1870
    %v1872 = vrot.slane %v1811, %v1871
    %vm1873 = vcmask 261312
    %v1874 = vsel %vm1873, %v1872, %v1867
    %v1875 = vadd.s32 %v1849, 4294967264
    %v1876 = vlaneseq
    %v1877 = vshrl.u32 %v1876, 7
    %v1878 = vsub.s32 %v1875, %v1877
    %v1879 = vrot.slane %v1814, %v1878
    %vm1880 = vcmask 326912
    %v1881 = vsel %vm1880, %v1879, %v1874
    %v1882 = vadd.s32 %v1849, 4294967256
    %v1883 = vlaneseq
    %v1884 = vshrl.u32 %v1883, 7
    %v1885 = vsub.s32 %v1882, %v1884
    %v1886 = vrot.slane %v1817, %v1885
    %vm1887 = vcmask 392512
    %v1888 = vsel %vm1887, %v1886, %v1881
    %v1889 = vadd.s32 %v1849, 4294967248
    %v1890 = vlaneseq
    %v1891 = vshrl.u32 %v1890, 7
    %v1892 = vsub.s32 %v1889, %v1891
    %v1893 = vrot.slane %v1820, %v1892
    %vm1894 = vcmask 458112
    %v1895 = vsel %vm1894, %v1893, %v1888
    %v1896 = vadd.s32 %v1849, 4294967240
    %v1897 = vlaneseq
    %v1898 = vshrl.u32 %v1897, 7
    %v1899 = vsub.s32 %v1896, %v1898
    %v1900 = vrot.slane %v1823, %v1899
    %vm1901 = vcmask 523712
    %v1902 = vsel %vm1901, %v1900, %v1895
    %v1903 = vadd.s32 %v1849, 4294967232
    %v1904 = vlaneseq
    %v1905 = vshrl.u32 %v1904, 7
    %v1906 = vsub.s32 %v1903, %v1905
    %v1907 = vrot.slane %v1826, %v1906
    %vm1908 = vcmask 589312
    %v1909 = vsel %vm1908, %v1907, %v1902
    %v1910 = vadd.s32 %v1849, 4294967224
    %v1911 = vlaneseq
    %v1912 = vshrl.u32 %v1911, 7
    %v1913 = vsub.s32 %v1910, %v1912
    %v1914 = vrot.slane %v1829, %v1913
    %vm1915 = vcmask 654912
    %v1916 = vsel %vm1915, %v1914, %v1909
    %v1917 = vadd.s32 %v1849, 4294967216
    %v1918 = vlaneseq
    %v1919 = vshrl.u32 %v1918, 7
    %v1920 = vsub.s32 %v1917, %v1919
    %v1921 = vrot.slane %v1832, %v1920
    %vm1922 = vcmask 720512
    %v1923 = vsel %vm1922, %v1921, %v1916
    %v1924 = vadd.s32 %v1849, 4294967208
    %v1925 = vlaneseq
    %v1926 = vshrl.u32 %v1925, 7
    %v1927 = vsub.s32 %v1924, %v1926
    %v1928 = vrot.slane %v1835, %v1927
    %vm1929 = vcmask 786112
    %v1930 = vsel %vm1929, %v1928, %v1923
    %v1931 = vadd.s32 %v1849, 4294967200
    %v1932 = vlaneseq
    %v1933 = vshrl.u32 %v1932, 7
    %v1934 = vsub.s32 %v1931, %v1933
    %v1935 = vrot.slane %v1838, %v1934
    %vm1936 = vcmask 851712
    %v1937 = vsel %vm1936, %v1935, %v1930
    %v1938 = vadd.s32 %v1849, 4294967192
    %v1939 = vlaneseq
    %v1940 = vshrl.u32 %v1939, 7
    %v1941 = vsub.s32 %v1938, %v1940
    %v1942 = vrot.slane %v1841, %v1941
    %vm1943 = vcmask 917312
    %v1944 = vsel %vm1943, %v1942, %v1937
    %v1945 = vadd.s32 %v1849, 4294967184
    %v1946 = vlaneseq
    %v1947 = vshrl.u32 %v1946, 7
    %v1948 = vsub.s32 %v1945, %v1947
    %v1949 = vrot.slane %v1844, %v1948
    %vm1950 = vcmask 982912
    %v1951 = vsel %vm1950, %v1949, %v1944
    %v1952 = vadd.s32 %v1849, 4294967176
    %v1953 = vlaneseq
    %v1954 = vshrl.u32 %v1953, 7
    %v1955 = vsub.s32 %v1952, %v1954
    %v1956 = vrot.slane %v1847, %v1955
    %vm1957 = vcmask 1048512
    %v1958 = vsel %vm1957, %v1956, %v1951
    %1960 = vst [vmem:[#allocation2] sm:$0x1] %v1958
    // Predicated region
    $region62: #{tpu_custom_call.1} parent=1 // pred_check
      _
    $region63: #{tpu_custom_call.1} parent=1 // pred_check_branch
      %1962 = sbr.rel (0) target = $region65
    $region64: #{tpu_custom_call.1} parent=1 // pred_region
      %s1964 = ssub.s32 16, 16
      %1965 = vsyncadd [#allocation3], %s1964
      %s1967 = sshll.u32 [#allocation2], 4
      %s1968 = int_to_ptr.vmem [resolvable:$true] %s1967
      %1970 = dma.vmem_to_hbm [thread:$0]  %s1968, 16, %s15, [#allocation3]
    $region65: #{tpu_custom_call.1} parent=1 // pred_fallthru
      _
    // Predicated region
    $region66: #{tpu_custom_call.1} parent=1 // pred_check
      _
    $region67: #{tpu_custom_call.1} parent=1 // pred_check_branch
      %1972 = sbr.rel (0) target = $region69
    $region68: #{tpu_custom_call.1} parent=1 // pred_region
      %1973 = dma.done [#allocation3], 16
    $region69: #{tpu_custom_call.1} parent=1 // pred_fallthru
      _
    %1974 = vsyncpa [#allocation3], 1

</llo_original>
